<compile_context>
chip_gen: v7x
topology: tpu7x:2x2x1
jax: 0.10.0
libtpu: 0.0.40
codegen_flags: <defaults>
</compile_context>

<pallas_src>
import functools

import jax
import jax.numpy as jnp
from jax.experimental import pallas as pl
from jax.experimental.pallas import tpu as pltpu


# ----------------------------- module config --------------------------------
NUM_ENCODING_FUNCTIONS = 6
INCLUDE_INPUT = True
LOG_SAMPLING = True
NORMALIZE = False
INPUT_DIM = 3
GAUSSIAN_PE = False   # TODO(synk): gaussian_pe branch (random-feature matmul) not implemented.
NORM_EXP = 1

# Octaves derived by double-angle recurrence before re-seeding with a direct
# sin/cos (bounds accumulated f32 error well below the 2e-5 tolerance).
RECURRENCE_CHAIN = 3

if LOG_SAMPLING:
    # 2 ** linspace(0, F-1, F) == exact powers of two
    _FREQS = tuple(2.0 ** k for k in range(NUM_ENCODING_FUNCTIONS))
else:
    _lo, _hi = 2.0 ** 0.0, 2.0 ** (NUM_ENCODING_FUNCTIONS - 1)
    _FREQS = tuple(
        _lo + (_hi - _lo) * k / (NUM_ENCODING_FUNCTIONS - 1)
        for k in range(NUM_ENCODING_FUNCTIONS))

_NORMS = tuple(1.0 / (f ** NORM_EXP) for f in _FREQS) if NORMALIZE else None
_N_FEAT = (1 if INCLUDE_INPUT else 0) + 2 * NUM_ENCODING_FUNCTIONS


# ------------------------------- kernel -------------------------------------
def _pe_kernel(x_ref, o_ref, *, freqs, norms, include_input, log_sampling, chain):
    """Lane-dense frequency encoding of one row tile.

    x_ref : (tile_rows, lane_width)            VMEM
    o_ref : (n_feat, tile_rows, lane_width)    VMEM  (one lane-dense slab per feature)
    """
    x = x_ref[...]
    xf32 = x.astype(jnp.float32)

    base = 0
    if include_input:
        o_ref[0] = x.astype(o_ref.dtype)
        base = 1

    s = c = None
    for k, f in enumerate(freqs):
        if log_sampling and s is not None and (k % chain) != 0:
            # Powers-of-two octave: sin(2a) = 2*s*c ; cos(2a) = 2*c*c - 1
            # (pure VPU FMAs, avoids the multi-op sin/cos polynomial sequence).
            s, c = 2.0 * s * c, 2.0 * c * c - 1.0
        else:
            arg = xf32 * f
            s = jnp.sin(arg)
            c = jnp.cos(arg)
        sk, ck = s, c
        if norms is not None:
            sk = norms[k] * sk
            ck = norms[k] * ck
        # Full-width (lane-dense) unmasked stores, one per feature slab.
        o_ref[base + 2 * k] = sk.astype(o_ref.dtype)
        o_ref[base + 2 * k + 1] = ck.astype(o_ref.dtype)


# ------------------------------- wrapper -------------------------------------
def _cdiv(a, b):
    return -(-a // b)


def _round_up(a, b):
    return _cdiv(a, b) * b


def _vmem_capacity_bytes():
    """Trace-time VMEM capacity query; conservative fallback (v7x per-TC)."""
    try:
        return int(pltpu.get_tpu_info().vmem_capacity_bytes)
    except Exception:
        return 64 * 1024 * 1024


@functools.partial(
    jax.jit, static_argnames=("lane_width", "tile_rows", "feature_major", "out_dtype"))
def positional_encoding(x, *, lane_width=512, tile_rows=None,
                        feature_major=False, out_dtype=None):
    """NeRF positional encoding of x with shape (..., input_dim).

    feature_major=False (default): returns (..., n_feat*input_dim) in the exact
        reference order [x, sin(f0 x), cos(f0 x), ...] (one fused relayout pass).
    feature_major=True: returns (n_feat, ..., input_dim) -- the kernel-native
        layout with no transpose pass (consumer permutes its first Linear).
    out_dtype: optional narrower output dtype (e.g. bf16) to halve writeback bytes.
    """
    assert lane_width % 128 == 0 and lane_width >= 128, "lane_width must be a multiple of 128"
    orig_shape = x.shape
    d = orig_shape[-1]
    n_feat = _N_FEAT
    out_d = d * n_feat
    out_dtype = jnp.dtype(x.dtype if out_dtype is None else out_dtype)

    # Flatten everything onto the lane axis (elementwise op: position-agnostic).
    flat = x.reshape(-1)
    total = flat.shape[0]
    rows = _cdiv(total, lane_width)

    # ---- generation-aware tile selection -----------------------------------
    cap = _vmem_capacity_bytes()
    if tile_rows is None:
        # 512 everywhere; 1024 only on 128 MiB-VMEM parts (v5e/v6e), never v7x.
        tile_rows = 1024 if cap >= (128 << 20) else 512
    max_tr = _round_up(max(int(tile_rows), 8), 8)

    # Cap tile so the double-buffered in+out footprint stays within ~80% of VMEM.
    bytes_per_row = lane_width * (x.dtype.itemsize + n_feat * out_dtype.itemsize) * 2
    vmem_budget = int(cap * 0.80)
    max_tr = min(max_tr, max(8, (vmem_budget // bytes_per_row) // 8 * 8))

    # ---- grid shaping: >=2 steps and an even step count (v7x megacore) -----
    steps = _cdiv(rows, max_tr)
    if steps == 1 and rows > 8:
        steps = 2
    if steps > 1 and steps % 2:
        steps += 1                      # shrink tr below instead of adding a pad tile
    tr = min(max_tr, _round_up(_cdiv(rows, steps), 8))
    rows_padded = steps * tr
    padded_total = rows_padded * lane_width

    if padded_total != total:
        flat = jnp.pad(flat, (0, padded_total - total))
    x2 = flat.reshape(rows_padded, lane_width)

    # VMEM limit from the actual double-buffered footprint (+ margin), capped to HW.
    footprint = 2 * tr * lane_width * (x.dtype.itemsize + n_feat * out_dtype.itemsize)
    vmem_limit = int(min(max(footprint + (4 << 20), 32 << 20), int(cap * 0.85)))

    kernel = functools.partial(
        _pe_kernel, freqs=_FREQS, norms=_NORMS, include_input=INCLUDE_INPUT,
        log_sampling=LOG_SAMPLING, chain=RECURRENCE_CHAIN)

    out = pl.pallas_call(
        kernel,
        out_shape=jax.ShapeDtypeStruct((n_feat, rows_padded, lane_width), out_dtype),
        grid=(steps,),
        in_specs=[pl.BlockSpec((tr, lane_width), lambda i: (i, 0))],
        out_specs=pl.BlockSpec((n_feat, tr, lane_width), lambda i: (0, i, 0)),
        compiler_params=pltpu.CompilerParams(
            dimension_semantics=("parallel",),      # shards grid steps across TCs on v7x
            vmem_limit_bytes=vmem_limit),
    )(x2)

    out = out.reshape(n_feat, padded_total)

    if feature_major:
        # Kernel-native layout: no (1,0,2) transpose pass (review's preferred path).
        out = out[:, :total]
        return out.reshape(n_feat, *orig_shape[:-1], d)

    # Single relayout pass to the reference order: slice + reshape + transpose
    # kept adjacent so XLA fuses them into one copy/transpose fusion.
    out = out[:, :total].reshape(n_feat, -1, d)
    out = jnp.transpose(out, (1, 0, 2))
    return out.reshape(*orig_shape[:-1], out_d)


# ------------------------------- reference -----------------------------------
def positional_encoding_ref(x):
    parts = [x] if INCLUDE_INPUT else []
    for idx, f in enumerate(_FREQS):
        for func in (jnp.sin, jnp.cos):
            v = func(x * f)
            if _NORMS is not None:
                v = _NORMS[idx] * v
            parts.append(v)
    return jnp.concatenate(parts, axis=-1)


# --------------------------------- main ---------------------------------------
if __name__ == "__main__":
    out_dim = INPUT_DIM * (1 + 2 * NUM_ENCODING_FUNCTIONS)

    # batch=2, points=64, input_dim=3  ->  output (2, 64, 39)
    x = jax.random.normal(jax.random.PRNGKey(0), (2, 64, INPUT_DIM), dtype=jnp.float32)
    out = jax.block_until_ready(positional_encoding(x))
    ref = positional_encoding_ref(x)
    assert out.shape == (2, 64, out_dim), out.shape
    assert jnp.allclose(out, ref, atol=2e-5, rtol=2e-5), \
        float(jnp.max(jnp.abs(out - ref)))

    # Odd shape to exercise padding / tail handling.
    x2 = jax.random.normal(jax.random.PRNGKey(1), (5, 7, INPUT_DIM), dtype=jnp.float32)
    out2 = jax.block_until_ready(positional_encoding(x2))
    ref2 = positional_encoding_ref(x2)
    assert out2.shape == (5, 7, out_dim), out2.shape
    assert jnp.allclose(out2, ref2, atol=2e-5, rtol=2e-5), \
        float(jnp.max(jnp.abs(out2 - ref2)))

    # Larger, padding-free shape exercising a multi-step (even) parallel grid.
    x3 = jax.random.normal(jax.random.PRNGKey(2), (4, 4096, INPUT_DIM), dtype=jnp.float32)
    out3 = jax.block_until_ready(positional_encoding(x3))
    ref3 = positional_encoding_ref(x3)
    assert out3.shape == (4, 4096, out_dim), out3.shape
    assert jnp.allclose(out3, ref3, atol=2e-5, rtol=2e-5), \
        float(jnp.max(jnp.abs(out3 - ref3)))

    # Feature-major fast path (no transpose pass) matches a permutation of the ref.
    out3_fm = jax.block_until_ready(positional_encoding(x3, feature_major=True))
    assert out3_fm.shape == (1 + 2 * NUM_ENCODING_FUNCTIONS, 4, 4096, INPUT_DIM), out3_fm.shape
    fm_as_ref = jnp.moveaxis(out3_fm, 0, -2).reshape(4, 4096, out_dim)
    assert jnp.allclose(fm_as_ref, ref3, atol=2e-5, rtol=2e-5), \
        float(jnp.max(jnp.abs(fm_as_ref - ref3)))

    print("KERNEL_OK")
</pallas_src>

<mosaic_0001>
module attributes {stable_mosaic.version = 11 : i64} {
  func.func @_pe_kernel(%arg0: i32, %arg1: memref<8x512xf32, #tpu.memory_space<vmem>>, %arg2: memref<13x8x512xf32, #tpu.memory_space<vmem>>) attributes {dimension_semantics = [#tpu.dimension_semantics<parallel>], iteration_bounds = array<i64: 1>, scalar_prefetch = 0 : i64, scratch_operands = 0 : i64, tpu.core_type = #tpu.core_type<tc>, window_params = [{transform_indices = @transform_0, window_bounds = array<i64: 8, 512>}, {transform_indices = @transform_1, window_bounds = array<i64: 13, 8, 512>}]} {
    %c0 = arith.constant 0 : index
    %c0_0 = arith.constant 0 : index
    %0 = vector.load %arg1[%c0, %c0_0] : memref<8x512xf32, #tpu.memory_space<vmem>>, vector<8x512xf32>
    %c0_1 = arith.constant 0 : index
    %c0_2 = arith.constant 0 : index
    %c0_3 = arith.constant 0 : index
    %1 = vector.load %arg2[%c0_1, %c0_2, %c0_3] : memref<13x8x512xf32, #tpu.memory_space<vmem>>, vector<1x8x512xf32>
    %2 = vector.shape_cast %1 : vector<1x8x512xf32> to vector<8x512xf32>
    %3 = vector.shape_cast %0 : vector<8x512xf32> to vector<1x8x512xf32>
    tpu.vector_store %arg2[%c0_1, %c0_2, %c0_3], %3 {strides = array<i32>} : memref<13x8x512xf32, #tpu.memory_space<vmem>>, vector<1x8x512xf32>,
    %cst = arith.constant 1.000000e+00 : f32
    %4 = vector.broadcast %cst : f32 to vector<8x512xf32>
    %5 = arith.mulf %0, %4 : vector<8x512xf32>
    %6 = math.sin %5 : vector<8x512xf32>
    %7 = math.cos %5 : vector<8x512xf32>
    %c1 = arith.constant 1 : index
    %c0_4 = arith.constant 0 : index
    %c0_5 = arith.constant 0 : index
    %8 = vector.load %arg2[%c1, %c0_4, %c0_5] : memref<13x8x512xf32, #tpu.memory_space<vmem>>, vector<1x8x512xf32>
    %9 = vector.shape_cast %8 : vector<1x8x512xf32> to vector<8x512xf32>
    %10 = vector.shape_cast %6 : vector<8x512xf32> to vector<1x8x512xf32>
    tpu.vector_store %arg2[%c1, %c0_4, %c0_5], %10 {strides = array<i32>} : memref<13x8x512xf32, #tpu.memory_space<vmem>>, vector<1x8x512xf32>,
    %c2 = arith.constant 2 : index
    %c0_6 = arith.constant 0 : index
    %c0_7 = arith.constant 0 : index
    %11 = vector.load %arg2[%c2, %c0_6, %c0_7] : memref<13x8x512xf32, #tpu.memory_space<vmem>>, vector<1x8x512xf32>
    %12 = vector.shape_cast %11 : vector<1x8x512xf32> to vector<8x512xf32>
    %13 = vector.shape_cast %7 : vector<8x512xf32> to vector<1x8x512xf32>
    tpu.vector_store %arg2[%c2, %c0_6, %c0_7], %13 {strides = array<i32>} : memref<13x8x512xf32, #tpu.memory_space<vmem>>, vector<1x8x512xf32>,
    %cst_8 = arith.constant 2.000000e+00 : f32
    %14 = vector.broadcast %cst_8 : f32 to vector<8x512xf32>
    %15 = arith.mulf %14, %6 : vector<8x512xf32>
    %16 = arith.mulf %15, %7 : vector<8x512xf32>
    %cst_9 = arith.constant 2.000000e+00 : f32
    %17 = vector.broadcast %cst_9 : f32 to vector<8x512xf32>
    %18 = arith.mulf %17, %7 : vector<8x512xf32>
    %19 = arith.mulf %18, %7 : vector<8x512xf32>
    %cst_10 = arith.constant 1.000000e+00 : f32
    %20 = vector.broadcast %cst_10 : f32 to vector<8x512xf32>
    %21 = arith.subf %19, %20 : vector<8x512xf32>
    %c3 = arith.constant 3 : index
    %c0_11 = arith.constant 0 : index
    %c0_12 = arith.constant 0 : index
    %22 = vector.load %arg2[%c3, %c0_11, %c0_12] : memref<13x8x512xf32, #tpu.memory_space<vmem>>, vector<1x8x512xf32>
    %23 = vector.shape_cast %22 : vector<1x8x512xf32> to vector<8x512xf32>
    %24 = vector.shape_cast %16 : vector<8x512xf32> to vector<1x8x512xf32>
    tpu.vector_store %arg2[%c3, %c0_11, %c0_12], %24 {strides = array<i32>} : memref<13x8x512xf32, #tpu.memory_space<vmem>>, vector<1x8x512xf32>,
    %c4 = arith.constant 4 : index
    %c0_13 = arith.constant 0 : index
    %c0_14 = arith.constant 0 : index
    %25 = vector.load %arg2[%c4, %c0_13, %c0_14] : memref<13x8x512xf32, #tpu.memory_space<vmem>>, vector<1x8x512xf32>
    %26 = vector.shape_cast %25 : vector<1x8x512xf32> to vector<8x512xf32>
    %27 = vector.shape_cast %21 : vector<8x512xf32> to vector<1x8x512xf32>
    tpu.vector_store %arg2[%c4, %c0_13, %c0_14], %27 {strides = array<i32>} : memref<13x8x512xf32, #tpu.memory_space<vmem>>, vector<1x8x512xf32>,
    %cst_15 = arith.constant 2.000000e+00 : f32
    %28 = vector.broadcast %cst_15 : f32 to vector<8x512xf32>
    %29 = arith.mulf %28, %16 : vector<8x512xf32>
    %30 = arith.mulf %29, %21 : vector<8x512xf32>
    %cst_16 = arith.constant 2.000000e+00 : f32
    %31 = vector.broadcast %cst_16 : f32 to vector<8x512xf32>
    %32 = arith.mulf %31, %21 : vector<8x512xf32>
    %33 = arith.mulf %32, %21 : vector<8x512xf32>
    %cst_17 = arith.constant 1.000000e+00 : f32
    %34 = vector.broadcast %cst_17 : f32 to vector<8x512xf32>
    %35 = arith.subf %33, %34 : vector<8x512xf32>
    %c5 = arith.constant 5 : index
    %c0_18 = arith.constant 0 : index
    %c0_19 = arith.constant 0 : index
    %36 = vector.load %arg2[%c5, %c0_18, %c0_19] : memref<13x8x512xf32, #tpu.memory_space<vmem>>, vector<1x8x512xf32>
    %37 = vector.shape_cast %36 : vector<1x8x512xf32> to vector<8x512xf32>
    %38 = vector.shape_cast %30 : vector<8x512xf32> to vector<1x8x512xf32>
    tpu.vector_store %arg2[%c5, %c0_18, %c0_19], %38 {strides = array<i32>} : memref<13x8x512xf32, #tpu.memory_space<vmem>>, vector<1x8x512xf32>,
    %c6 = arith.constant 6 : index
    %c0_20 = arith.constant 0 : index
    %c0_21 = arith.constant 0 : index
    %39 = vector.load %arg2[%c6, %c0_20, %c0_21] : memref<13x8x512xf32, #tpu.memory_space<vmem>>, vector<1x8x512xf32>
    %40 = vector.shape_cast %39 : vector<1x8x512xf32> to vector<8x512xf32>
    %41 = vector.shape_cast %35 : vector<8x512xf32> to vector<1x8x512xf32>
    tpu.vector_store %arg2[%c6, %c0_20, %c0_21], %41 {strides = array<i32>} : memref<13x8x512xf32, #tpu.memory_space<vmem>>, vector<1x8x512xf32>,
    %cst_22 = arith.constant 8.000000e+00 : f32
    %42 = vector.broadcast %cst_22 : f32 to vector<8x512xf32>
    %43 = arith.mulf %0, %42 : vector<8x512xf32>
    %44 = math.sin %43 : vector<8x512xf32>
    %45 = math.cos %43 : vector<8x512xf32>
    %c7 = arith.constant 7 : index
    %c0_23 = arith.constant 0 : index
    %c0_24 = arith.constant 0 : index
    %46 = vector.load %arg2[%c7, %c0_23, %c0_24] : memref<13x8x512xf32, #tpu.memory_space<vmem>>, vector<1x8x512xf32>
    %47 = vector.shape_cast %46 : vector<1x8x512xf32> to vector<8x512xf32>
    %48 = vector.shape_cast %44 : vector<8x512xf32> to vector<1x8x512xf32>
    tpu.vector_store %arg2[%c7, %c0_23, %c0_24], %48 {strides = array<i32>} : memref<13x8x512xf32, #tpu.memory_space<vmem>>, vector<1x8x512xf32>,
    %c8 = arith.constant 8 : index
    %c0_25 = arith.constant 0 : index
    %c0_26 = arith.constant 0 : index
    %49 = vector.load %arg2[%c8, %c0_25, %c0_26] : memref<13x8x512xf32, #tpu.memory_space<vmem>>, vector<1x8x512xf32>
    %50 = vector.shape_cast %49 : vector<1x8x512xf32> to vector<8x512xf32>
    %51 = vector.shape_cast %45 : vector<8x512xf32> to vector<1x8x512xf32>
    tpu.vector_store %arg2[%c8, %c0_25, %c0_26], %51 {strides = array<i32>} : memref<13x8x512xf32, #tpu.memory_space<vmem>>, vector<1x8x512xf32>,
    %cst_27 = arith.constant 2.000000e+00 : f32
    %52 = vector.broadcast %cst_27 : f32 to vector<8x512xf32>
    %53 = arith.mulf %52, %44 : vector<8x512xf32>
    %54 = arith.mulf %53, %45 : vector<8x512xf32>
    %cst_28 = arith.constant 2.000000e+00 : f32
    %55 = vector.broadcast %cst_28 : f32 to vector<8x512xf32>
    %56 = arith.mulf %55, %45 : vector<8x512xf32>
    %57 = arith.mulf %56, %45 : vector<8x512xf32>
    %cst_29 = arith.constant 1.000000e+00 : f32
    %58 = vector.broadcast %cst_29 : f32 to vector<8x512xf32>
    %59 = arith.subf %57, %58 : vector<8x512xf32>
    %c9 = arith.constant 9 : index
    %c0_30 = arith.constant 0 : index
    %c0_31 = arith.constant 0 : index
    %60 = vector.load %arg2[%c9, %c0_30, %c0_31] : memref<13x8x512xf32, #tpu.memory_space<vmem>>, vector<1x8x512xf32>
    %61 = vector.shape_cast %60 : vector<1x8x512xf32> to vector<8x512xf32>
    %62 = vector.shape_cast %54 : vector<8x512xf32> to vector<1x8x512xf32>
    tpu.vector_store %arg2[%c9, %c0_30, %c0_31], %62 {strides = array<i32>} : memref<13x8x512xf32, #tpu.memory_space<vmem>>, vector<1x8x512xf32>,
    %c10 = arith.constant 10 : index
    %c0_32 = arith.constant 0 : index
    %c0_33 = arith.constant 0 : index
    %63 = vector.load %arg2[%c10, %c0_32, %c0_33] : memref<13x8x512xf32, #tpu.memory_space<vmem>>, vector<1x8x512xf32>
    %64 = vector.shape_cast %63 : vector<1x8x512xf32> to vector<8x512xf32>
    %65 = vector.shape_cast %59 : vector<8x512xf32> to vector<1x8x512xf32>
    tpu.vector_store %arg2[%c10, %c0_32, %c0_33], %65 {strides = array<i32>} : memref<13x8x512xf32, #tpu.memory_space<vmem>>, vector<1x8x512xf32>,
    %cst_34 = arith.constant 2.000000e+00 : f32
    %66 = vector.broadcast %cst_34 : f32 to vector<8x512xf32>
    %67 = arith.mulf %66, %54 : vector<8x512xf32>
    %68 = arith.mulf %67, %59 : vector<8x512xf32>
    %cst_35 = arith.constant 2.000000e+00 : f32
    %69 = vector.broadcast %cst_35 : f32 to vector<8x512xf32>
    %70 = arith.mulf %69, %59 : vector<8x512xf32>
    %71 = arith.mulf %70, %59 : vector<8x512xf32>
    %cst_36 = arith.constant 1.000000e+00 : f32
    %72 = vector.broadcast %cst_36 : f32 to vector<8x512xf32>
    %73 = arith.subf %71, %72 : vector<8x512xf32>
    %c11 = arith.constant 11 : index
    %c0_37 = arith.constant 0 : index
    %c0_38 = arith.constant 0 : index
    %74 = vector.load %arg2[%c11, %c0_37, %c0_38] : memref<13x8x512xf32, #tpu.memory_space<vmem>>, vector<1x8x512xf32>
    %75 = vector.shape_cast %74 : vector<1x8x512xf32> to vector<8x512xf32>
    %76 = vector.shape_cast %68 : vector<8x512xf32> to vector<1x8x512xf32>
    tpu.vector_store %arg2[%c11, %c0_37, %c0_38], %76 {strides = array<i32>} : memref<13x8x512xf32, #tpu.memory_space<vmem>>, vector<1x8x512xf32>,
    %c12 = arith.constant 12 : index
    %c0_39 = arith.constant 0 : index
    %c0_40 = arith.constant 0 : index
    %77 = vector.load %arg2[%c12, %c0_39, %c0_40] : memref<13x8x512xf32, #tpu.memory_space<vmem>>, vector<1x8x512xf32>
    %78 = vector.shape_cast %77 : vector<1x8x512xf32> to vector<8x512xf32>
    %79 = vector.shape_cast %73 : vector<8x512xf32> to vector<1x8x512xf32>
    tpu.vector_store %arg2[%c12, %c0_39, %c0_40], %79 {strides = array<i32>} : memref<13x8x512xf32, #tpu.memory_space<vmem>>, vector<1x8x512xf32>,
    return
  }
  func.func @transform_0(%arg0: i32) -> (i32, i32) {
    %c0_i32 = arith.constant 0 : i32
    %c0_i32_0 = arith.constant 0 : i32
    return %arg0, %c0_i32 : i32, i32
  }
  func.func @transform_1(%arg0: i32) -> (i32, i32, i32) {
    %c0_i32 = arith.constant 0 : i32
    %c0_i32_0 = arith.constant 0 : i32
    %c0_i32_1 = arith.constant 0 : i32
    return %c0_i32, %arg0, %c0_i32_0 : i32, i32, i32
  }
}

</mosaic_0001>

<llo_original>
// kernel: positional_encoding.1
$region0: #{positional_encoding.1}
  #allocation0 [shape = 'u32[]', space=smem, size = 0x4, offset = 0x4, fixed_abs, tag = 'smem constant byte address 0x4 - core index']
  #allocation1 [shape = 'u32[144,128]{1,0:T(1,128)}', space=vmem, size = 0x12000, scoped, tag = 'internal scratch']
  %s0 = inlined_call_operand.vmem [shape: f32[8,512], index: 0, kind: input, shape index: {}]
  %s1 = inlined_call_operand.vmem [shape: f32[13,8,512], index: 1, kind: output, shape index: {}]
  %s2 = sld [smem:[#allocation0]]
  $region14: #{positional_encoding.1} parent=0
    _
  %s4 = ssub.s32 1, %s2
  %s5 = scalar_select 0, %s4, %s2
  // Predicated region
  $region2: #{positional_encoding.1} parent=0 // pred_check
    _
  $region3: #{positional_encoding.1} parent=0 // pred_check_branch
    %7 = sbr.rel (0) target = $region5
  $region4: #{positional_encoding.1} parent=0 // pred_region
    _
  $region5: #{positional_encoding.1} parent=0 // pred_fallthru
    _
  %v8 = vld [vmem:[%s0] sm:$0xff]
  %v9 = vld [vmem:[%s0 + $0x8] sm:$0xff]
  %v10 = vld [vmem:[%s0 + $0x10] sm:$0xff]
  %v11 = vld [vmem:[%s0 + $0x18] sm:$0xff]
  %12 = vst [vmem:[%s1] sm:$0xff] %v8
  %13 = vst [vmem:[%s1 + $0x8] sm:$0xff] %v9
  %14 = vst [vmem:[%s1 + $0x10] sm:$0xff] %v10
  %15 = vst [vmem:[%s1 + $0x18] sm:$0xff] %v11
  %v16 = vand.u32 2147483647, %v8
  %vm17 = vcmp.le.f32.partialorder %v16, 0.7853982
  %vm18 = vcmp.lt.s32.totalorder %v8, 0
  %v19 = vand.u32 %v8, 2139095040
  %v20 = vshrl.u32 %v19, 23
  %v21 = vsub.s32 %v20, 127
  %v22 = vand.u32 2147483647, %v8
  %v23 = vand.u32 %v22, 8388607
  %v24 = vor.u32 %v23, 8388608
  %v25 = vsub.s32 0, %v24
  %v26 = vadd.s32 %v21, 1
  %vm27 = vcmp.gt.s32.totalorder %v26, 0
  %v28 = vsel %vm27, %v26, 0
  %v29 = vshrl.u32 %v28, 5
  %v30 = vand.u32 %v28, 31
  %v31 = vsub.s32 32, %v30
  %v32 = vshrl.u32 683565275, %v31
  %v33 = vshll.u32 683565275, %v30
  %v34 = vshrl.u32 2475754826, %v31
  %v35 = vor.u32 %v33, %v34
  %v36 = vshll.u32 2475754826, %v30
  %v37 = vshrl.u32 2131351028, %v31
  %v38 = vor.u32 %v36, %v37
  %v39 = vshll.u32 2131351028, %v30
  %v40 = vshrl.u32 2102212464, %v31
  %v41 = vor.u32 %v39, %v40
  %v42 = vshll.u32 2102212464, %v30
  %v43 = vshrl.u32 920167782, %v31
  %v44 = vor.u32 %v42, %v43
  %v45 = vshll.u32 920167782, %v30
  %v46 = vshrl.u32 1326507024, %v31
  %v47 = vor.u32 %v45, %v46
  %vm48 = vcmp.lt.s32.totalorder %v29, 1
  %vm49 = vcmp.lt.s32.totalorder %v29, 2
  %vm50 = vcmp.lt.s32.totalorder %v29, 3
  %vm51 = vcmp.lt.s32.totalorder %v29, 4
  %v52 = vsel %vm48, %v32, %v35
  %v53 = vsel %vm51, %v41, 2102212464
  %v54 = vsel %vm50, %v38, %v53
  %v55 = vsel %vm49, %v52, %v54
  %v56 = vsel %vm48, %v35, %v38
  %v57 = vsel %vm51, %v44, 920167782
  %v58 = vsel %vm50, %v41, %v57
  %v59 = vsel %vm49, %v56, %v58
  %v60 = vsel %vm48, %v38, %v41
  %v61 = vsel %vm51, %v47, 1326507024
  %v62 = vsel %vm50, %v44, %v61
  %v63 = vsel %vm49, %v60, %v62
  %v64 = vshll.u32 %v24, 8
  %v65 = vmul.u32.u64.compose %v64, %v63
  %v66 = vextract.low.u32 %v65
  %v67 = vextract.high.u32 %v65
  %v68 = vmul.u32.u64.compose %v64, %v59
  %v69 = vextract.low.u32 %v68
  %v70 = vextract.high.u32 %v68
  %v71 = vmul.u32 %v64, %v55
  %v72 = vadd.s32 %v67, %v69
  %vm73 = vc.u32 %v67, %v69
  %v74 = vadd.s32 %v70, 1
  %v75 = vsel %vm73, %v74, %v70
  %v76 = vadd.s32 %v71, %v75
  %v77 = vadd.s32 %v76, 536870912
  %v78 = vshrl.u32 %v77, 30
  %v79 = vshll.u32 %v78, 30
  %v80 = vsub.s32 %v76, %v79
  %vm81 = vcmp.lt.s32.totalorder %v80, 0
  %v82 = vsub.s32 0, %v80
  %v83 = vsel %vm81, %v82, %v80
  %v84 = vclz %v83
  %v85 = vsub.s32 %v84, 2
  %vm86 = vcmp.gt.s32.totalorder 0, %v85
  %v87 = vsel %vm86, 0, %v85
  %v88 = vsub.s32 32, %v87
  %v89 = vshll.u32 %v80, %v87
  %v90 = vshrl.u32 %v72, %v88
  %v91 = vor.u32 %v89, %v90
  %v92 = vsub.s32 4294967266, %v87
  %v93 = vadd.s32 %v92, 127
  %v94 = vshll.u32 %v93, 23
  %v95 = vor.u32 4788187, %v94
  %v96 = vand.u32 2147483647, %v95
  %v98 = vcvt.s32.f32 %v91
  %v99 = vmul.f32 %v98, %v96
  %v100 = vxor.u32 %v99, 2147483648
  %v101 = vsel %vm18, %v100, %v99
  %v102 = vsub.s32 4, %v78
  %v103 = vsel %vm18, %v102, %v78
  %v104 = vsel %vm17, %v8, %v101
  %v105 = vsel %vm17, 0, %v103
  %v106 = vcosq.f32.pop %v104
  %v107 = vsinq.f32.pop %v104
  %vm108 = vweird.f32 %v8
  %v109 = vadd.s32 %v105, 3
  %v110 = vand.u32 %v109, 3
  %vm111 = vcmp.lt.s32.totalorder %v110, 2
  %vm112 = vcmp.eq.s32.totalorder %v110, 0
  %v113 = vxor.u32 %v107, 2147483648
  %v114 = vsel %vm112, %v106, %v113
  %vm115 = vcmp.eq.s32.totalorder %v110, 2
  %v116 = vxor.u32 %v106, 2147483648
  %v117 = vsel %vm115, %v116, %v107
  %v118 = vsel %vm111, %v114, %v117
  %v119 = vsel %vm108, nan, %v118
  %v120 = vand.u32 2147483647, %v9
  %vm121 = vcmp.le.f32.partialorder %v120, 0.7853982
  %vm122 = vcmp.lt.s32.totalorder %v9, 0
  %v123 = vand.u32 %v9, 2139095040
  %v124 = vshrl.u32 %v123, 23
  %v125 = vsub.s32 %v124, 127
  %v126 = vand.u32 2147483647, %v9
  %v127 = vand.u32 %v126, 8388607
  %v128 = vor.u32 %v127, 8388608
  %v129 = vsub.s32 0, %v128
  %v130 = vadd.s32 %v125, 1
  %vm131 = vcmp.gt.s32.totalorder %v130, 0
  %v132 = vsel %vm131, %v130, 0
  %v133 = vshrl.u32 %v132, 5
  %v134 = vand.u32 %v132, 31
  %v135 = vsub.s32 32, %v134
  %v136 = vshrl.u32 683565275, %v135
  %v137 = vshll.u32 683565275, %v134
  %v138 = vshrl.u32 2475754826, %v135
  %v139 = vor.u32 %v137, %v138
  %v140 = vshll.u32 2475754826, %v134
  %v141 = vshrl.u32 2131351028, %v135
  %v142 = vor.u32 %v140, %v141
  %v143 = vshll.u32 2131351028, %v134
  %v144 = vshrl.u32 2102212464, %v135
  %v145 = vor.u32 %v143, %v144
  %v146 = vshll.u32 2102212464, %v134
  %v147 = vshrl.u32 920167782, %v135
  %v148 = vor.u32 %v146, %v147
  %v149 = vshll.u32 920167782, %v134
  %v150 = vshrl.u32 1326507024, %v135
  %v151 = vor.u32 %v149, %v150
  %vm152 = vcmp.lt.s32.totalorder %v133, 1
  %vm153 = vcmp.lt.s32.totalorder %v133, 2
  %vm154 = vcmp.lt.s32.totalorder %v133, 3
  %vm155 = vcmp.lt.s32.totalorder %v133, 4
  %v156 = vsel %vm152, %v136, %v139
  %v157 = vsel %vm155, %v145, 2102212464
  %v158 = vsel %vm154, %v142, %v157
  %v159 = vsel %vm153, %v156, %v158
  %v160 = vsel %vm152, %v139, %v142
  %v161 = vsel %vm155, %v148, 920167782
  %v162 = vsel %vm154, %v145, %v161
  %v163 = vsel %vm153, %v160, %v162
  %v164 = vsel %vm152, %v142, %v145
  %v165 = vsel %vm155, %v151, 1326507024
  %v166 = vsel %vm154, %v148, %v165
  %v167 = vsel %vm153, %v164, %v166
  %v168 = vshll.u32 %v128, 8
  %v169 = vmul.u32.u64.compose %v168, %v167
  %v170 = vextract.low.u32 %v169
  %v171 = vextract.high.u32 %v169
  %v172 = vmul.u32.u64.compose %v168, %v163
  %v173 = vextract.low.u32 %v172
  %v174 = vextract.high.u32 %v172
  %v175 = vmul.u32 %v168, %v159
  %v176 = vadd.s32 %v171, %v173
  %vm177 = vc.u32 %v171, %v173
  %v178 = vadd.s32 %v174, 1
  %v179 = vsel %vm177, %v178, %v174
  %v180 = vadd.s32 %v175, %v179
  %v181 = vadd.s32 %v180, 536870912
  %v182 = vshrl.u32 %v181, 30
  %v183 = vshll.u32 %v182, 30
  %v184 = vsub.s32 %v180, %v183
  %vm185 = vcmp.lt.s32.totalorder %v184, 0
  %v186 = vsub.s32 0, %v184
  %v187 = vsel %vm185, %v186, %v184
  %v188 = vclz %v187
  %v189 = vsub.s32 %v188, 2
  %vm190 = vcmp.gt.s32.totalorder 0, %v189
  %v191 = vsel %vm190, 0, %v189
  %v192 = vsub.s32 32, %v191
  %v193 = vshll.u32 %v184, %v191
  %v194 = vshrl.u32 %v176, %v192
  %v195 = vor.u32 %v193, %v194
  %v196 = vsub.s32 4294967266, %v191
  %v197 = vadd.s32 %v196, 127
  %v198 = vshll.u32 %v197, 23
  %v199 = vor.u32 4788187, %v198
  %v200 = vand.u32 2147483647, %v199
  %v202 = vcvt.s32.f32 %v195
  %v203 = vmul.f32 %v202, %v200
  %v204 = vxor.u32 %v203, 2147483648
  %v205 = vsel %vm122, %v204, %v203
  %v206 = vsub.s32 4, %v182
  %v207 = vsel %vm122, %v206, %v182
  %v208 = vsel %vm121, %v9, %v205
  %v209 = vsel %vm121, 0, %v207
  %v210 = vcosq.f32.pop %v208
  %v211 = vsinq.f32.pop %v208
  %vm212 = vweird.f32 %v9
  %v213 = vadd.s32 %v209, 3
  %v214 = vand.u32 %v213, 3
  %vm215 = vcmp.lt.s32.totalorder %v214, 2
  %vm216 = vcmp.eq.s32.totalorder %v214, 0
  %v217 = vxor.u32 %v211, 2147483648
  %v218 = vsel %vm216, %v210, %v217
  %vm219 = vcmp.eq.s32.totalorder %v214, 2
  %v220 = vxor.u32 %v210, 2147483648
  %v221 = vsel %vm219, %v220, %v211
  %v222 = vsel %vm215, %v218, %v221
  %v223 = vsel %vm212, nan, %v222
  %v224 = vand.u32 2147483647, %v10
  %vm225 = vcmp.le.f32.partialorder %v224, 0.7853982
  %vm226 = vcmp.lt.s32.totalorder %v10, 0
  %v227 = vand.u32 %v10, 2139095040
  %v228 = vshrl.u32 %v227, 23
  %v229 = vsub.s32 %v228, 127
  %v230 = vand.u32 2147483647, %v10
  %v231 = vand.u32 %v230, 8388607
  %v232 = vor.u32 %v231, 8388608
  %v233 = vsub.s32 0, %v232
  %v234 = vadd.s32 %v229, 1
  %vm235 = vcmp.gt.s32.totalorder %v234, 0
  %v236 = vsel %vm235, %v234, 0
  %v237 = vshrl.u32 %v236, 5
  %v238 = vand.u32 %v236, 31
  %v239 = vsub.s32 32, %v238
  %v240 = vshrl.u32 683565275, %v239
  %v241 = vshll.u32 683565275, %v238
  %v242 = vshrl.u32 2475754826, %v239
  %v243 = vor.u32 %v241, %v242
  %v244 = vshll.u32 2475754826, %v238
  %v245 = vshrl.u32 2131351028, %v239
  %v246 = vor.u32 %v244, %v245
  %v247 = vshll.u32 2131351028, %v238
  %v248 = vshrl.u32 2102212464, %v239
  %v249 = vor.u32 %v247, %v248
  %v250 = vshll.u32 2102212464, %v238
  %v251 = vshrl.u32 920167782, %v239
  %v252 = vor.u32 %v250, %v251
  %v253 = vshll.u32 920167782, %v238
  %v254 = vshrl.u32 1326507024, %v239
  %v255 = vor.u32 %v253, %v254
  %vm256 = vcmp.lt.s32.totalorder %v237, 1
  %vm257 = vcmp.lt.s32.totalorder %v237, 2
  %vm258 = vcmp.lt.s32.totalorder %v237, 3
  %vm259 = vcmp.lt.s32.totalorder %v237, 4
  %v260 = vsel %vm256, %v240, %v243
  %v261 = vsel %vm259, %v249, 2102212464
  %v262 = vsel %vm258, %v246, %v261
  %v263 = vsel %vm257, %v260, %v262
  %v264 = vsel %vm256, %v243, %v246
  %v265 = vsel %vm259, %v252, 920167782
  %v266 = vsel %vm258, %v249, %v265
  %v267 = vsel %vm257, %v264, %v266
  %v268 = vsel %vm256, %v246, %v249
  %v269 = vsel %vm259, %v255, 1326507024
  %v270 = vsel %vm258, %v252, %v269
  %v271 = vsel %vm257, %v268, %v270
  %v272 = vshll.u32 %v232, 8
  %v273 = vmul.u32.u64.compose %v272, %v271
  %v274 = vextract.low.u32 %v273
  %v275 = vextract.high.u32 %v273
  %v276 = vmul.u32.u64.compose %v272, %v267
  %v277 = vextract.low.u32 %v276
  %v278 = vextract.high.u32 %v276
  %v279 = vmul.u32 %v272, %v263
  %v280 = vadd.s32 %v275, %v277
  %vm281 = vc.u32 %v275, %v277
  %v282 = vadd.s32 %v278, 1
  %v283 = vsel %vm281, %v282, %v278
  %v284 = vadd.s32 %v279, %v283
  %v285 = vadd.s32 %v284, 536870912
  %v286 = vshrl.u32 %v285, 30
  %v287 = vshll.u32 %v286, 30
  %v288 = vsub.s32 %v284, %v287
  %vm289 = vcmp.lt.s32.totalorder %v288, 0
  %v290 = vsub.s32 0, %v288
  %v291 = vsel %vm289, %v290, %v288
  %v292 = vclz %v291
  %v293 = vsub.s32 %v292, 2
  %vm294 = vcmp.gt.s32.totalorder 0, %v293
  %v295 = vsel %vm294, 0, %v293
  %v296 = vsub.s32 32, %v295
  %v297 = vshll.u32 %v288, %v295
  %v298 = vshrl.u32 %v280, %v296
  %v299 = vor.u32 %v297, %v298
  %v300 = vsub.s32 4294967266, %v295
  %v301 = vadd.s32 %v300, 127
  %v302 = vshll.u32 %v301, 23
  %v303 = vor.u32 4788187, %v302
  %v304 = vand.u32 2147483647, %v303
  %v306 = vcvt.s32.f32 %v299
  %v307 = vmul.f32 %v306, %v304
  %v308 = vxor.u32 %v307, 2147483648
  %v309 = vsel %vm226, %v308, %v307
  %v310 = vsub.s32 4, %v286
  %v311 = vsel %vm226, %v310, %v286
  %v312 = vsel %vm225, %v10, %v309
  %v313 = vsel %vm225, 0, %v311
  %v314 = vcosq.f32.pop %v312
  %v315 = vsinq.f32.pop %v312
  %vm316 = vweird.f32 %v10
  %v317 = vadd.s32 %v313, 3
  %v318 = vand.u32 %v317, 3
  %vm319 = vcmp.lt.s32.totalorder %v318, 2
  %vm320 = vcmp.eq.s32.totalorder %v318, 0
  %v321 = vxor.u32 %v315, 2147483648
  %v322 = vsel %vm320, %v314, %v321
  %vm323 = vcmp.eq.s32.totalorder %v318, 2
  %v324 = vxor.u32 %v314, 2147483648
  %v325 = vsel %vm323, %v324, %v315
  %v326 = vsel %vm319, %v322, %v325
  %v327 = vsel %vm316, nan, %v326
  %v328 = vand.u32 2147483647, %v11
  %vm329 = vcmp.le.f32.partialorder %v328, 0.7853982
  %vm330 = vcmp.lt.s32.totalorder %v11, 0
  %v331 = vand.u32 %v11, 2139095040
  %v332 = vshrl.u32 %v331, 23
  %v333 = vsub.s32 %v332, 127
  %v334 = vand.u32 2147483647, %v11
  %v335 = vand.u32 %v334, 8388607
  %v336 = vor.u32 %v335, 8388608
  %v337 = vsub.s32 0, %v336
  %v338 = vadd.s32 %v333, 1
  %vm339 = vcmp.gt.s32.totalorder %v338, 0
  %v340 = vsel %vm339, %v338, 0
  %v341 = vshrl.u32 %v340, 5
  %v342 = vand.u32 %v340, 31
  %v343 = vsub.s32 32, %v342
  %v344 = vshrl.u32 683565275, %v343
  %v345 = vshll.u32 683565275, %v342
  %v346 = vshrl.u32 2475754826, %v343
  %v347 = vor.u32 %v345, %v346
  %v348 = vshll.u32 2475754826, %v342
  %v349 = vshrl.u32 2131351028, %v343
  %v350 = vor.u32 %v348, %v349
  %v351 = vshll.u32 2131351028, %v342
  %v352 = vshrl.u32 2102212464, %v343
  %v353 = vor.u32 %v351, %v352
  %v354 = vshll.u32 2102212464, %v342
  %v355 = vshrl.u32 920167782, %v343
  %v356 = vor.u32 %v354, %v355
  %v357 = vshll.u32 920167782, %v342
  %v358 = vshrl.u32 1326507024, %v343
  %v359 = vor.u32 %v357, %v358
  %vm360 = vcmp.lt.s32.totalorder %v341, 1
  %vm361 = vcmp.lt.s32.totalorder %v341, 2
  %vm362 = vcmp.lt.s32.totalorder %v341, 3
  %vm363 = vcmp.lt.s32.totalorder %v341, 4
  %v364 = vsel %vm360, %v344, %v347
  %v365 = vsel %vm363, %v353, 2102212464
  %v366 = vsel %vm362, %v350, %v365
  %v367 = vsel %vm361, %v364, %v366
  %v368 = vsel %vm360, %v347, %v350
  %v369 = vsel %vm363, %v356, 920167782
  %v370 = vsel %vm362, %v353, %v369
  %v371 = vsel %vm361, %v368, %v370
  %v372 = vsel %vm360, %v350, %v353
  %v373 = vsel %vm363, %v359, 1326507024
  %v374 = vsel %vm362, %v356, %v373
  %v375 = vsel %vm361, %v372, %v374
  %v376 = vshll.u32 %v336, 8
  %v377 = vmul.u32.u64.compose %v376, %v375
  %v378 = vextract.low.u32 %v377
  %v379 = vextract.high.u32 %v377
  %v380 = vmul.u32.u64.compose %v376, %v371
  %v381 = vextract.low.u32 %v380
  %v382 = vextract.high.u32 %v380
  %v383 = vmul.u32 %v376, %v367
  %v384 = vadd.s32 %v379, %v381
  %vm385 = vc.u32 %v379, %v381
  %v386 = vadd.s32 %v382, 1
  %v387 = vsel %vm385, %v386, %v382
  %v388 = vadd.s32 %v383, %v387
  %v389 = vadd.s32 %v388, 536870912
  %v390 = vshrl.u32 %v389, 30
  %v391 = vshll.u32 %v390, 30
  %v392 = vsub.s32 %v388, %v391
  %vm393 = vcmp.lt.s32.totalorder %v392, 0
  %v394 = vsub.s32 0, %v392
  %v395 = vsel %vm393, %v394, %v392
  %v396 = vclz %v395
  %v397 = vsub.s32 %v396, 2
  %vm398 = vcmp.gt.s32.totalorder 0, %v397
  %v399 = vsel %vm398, 0, %v397
  %v400 = vsub.s32 32, %v399
  %v401 = vshll.u32 %v392, %v399
  %v402 = vshrl.u32 %v384, %v400
  %v403 = vor.u32 %v401, %v402
  %v404 = vsub.s32 4294967266, %v399
  %v405 = vadd.s32 %v404, 127
  %v406 = vshll.u32 %v405, 23
  %v407 = vor.u32 4788187, %v406
  %v408 = vand.u32 2147483647, %v407
  %v410 = vcvt.s32.f32 %v403
  %v411 = vmul.f32 %v410, %v408
  %v412 = vxor.u32 %v411, 2147483648
  %v413 = vsel %vm330, %v412, %v411
  %v414 = vsub.s32 4, %v390
  %v415 = vsel %vm330, %v414, %v390
  %v416 = vsel %vm329, %v11, %v413
  %v417 = vsel %vm329, 0, %v415
  %v418 = vcosq.f32.pop %v416
  %v419 = vsinq.f32.pop %v416
  %vm420 = vweird.f32 %v11
  %v421 = vadd.s32 %v417, 3
  %v422 = vand.u32 %v421, 3
  %vm423 = vcmp.lt.s32.totalorder %v422, 2
  %vm424 = vcmp.eq.s32.totalorder %v422, 0
  %v425 = vxor.u32 %v419, 2147483648
  %v426 = vsel %vm424, %v418, %v425
  %vm427 = vcmp.eq.s32.totalorder %v422, 2
  %v428 = vxor.u32 %v418, 2147483648
  %v429 = vsel %vm427, %v428, %v419
  %v430 = vsel %vm423, %v426, %v429
  %v431 = vsel %vm420, nan, %v430
  %v432 = vand.u32 2147483647, %v8
  %vm433 = vcmp.le.f32.partialorder %v432, 0.7853982
  %vm434 = vcmp.lt.s32.totalorder %v8, 0
  %v435 = vand.u32 %v8, 2139095040
  %v436 = vshrl.u32 %v435, 23
  %v437 = vsub.s32 %v436, 127
  %v438 = vand.u32 2147483647, %v8
  %v439 = vand.u32 %v438, 8388607
  %v440 = vor.u32 %v439, 8388608
  %v441 = vsub.s32 0, %v440
  %v442 = vadd.s32 %v437, 1
  %vm443 = vcmp.gt.s32.totalorder %v442, 0
  %v444 = vsel %vm443, %v442, 0
  %v445 = vshrl.u32 %v444, 5
  %v446 = vand.u32 %v444, 31
  %v447 = vsub.s32 32, %v446
  %v448 = vshrl.u32 683565275, %v447
  %v449 = vshll.u32 683565275, %v446
  %v450 = vshrl.u32 2475754826, %v447
  %v451 = vor.u32 %v449, %v450
  %v452 = vshll.u32 2475754826, %v446
  %v453 = vshrl.u32 2131351028, %v447
  %v454 = vor.u32 %v452, %v453
  %v455 = vshll.u32 2131351028, %v446
  %v456 = vshrl.u32 2102212464, %v447
  %v457 = vor.u32 %v455, %v456
  %v458 = vshll.u32 2102212464, %v446
  %v459 = vshrl.u32 920167782, %v447
  %v460 = vor.u32 %v458, %v459
  %v461 = vshll.u32 920167782, %v446
  %v462 = vshrl.u32 1326507024, %v447
  %v463 = vor.u32 %v461, %v462
  %vm464 = vcmp.lt.s32.totalorder %v445, 1
  %vm465 = vcmp.lt.s32.totalorder %v445, 2
  %vm466 = vcmp.lt.s32.totalorder %v445, 3
  %vm467 = vcmp.lt.s32.totalorder %v445, 4
  %v468 = vsel %vm464, %v448, %v451
  %v469 = vsel %vm467, %v457, 2102212464
  %v470 = vsel %vm466, %v454, %v469
  %v471 = vsel %vm465, %v468, %v470
  %v472 = vsel %vm464, %v451, %v454
  %v473 = vsel %vm467, %v460, 920167782
  %v474 = vsel %vm466, %v457, %v473
  %v475 = vsel %vm465, %v472, %v474
  %v476 = vsel %vm464, %v454, %v457
  %v477 = vsel %vm467, %v463, 1326507024
  %v478 = vsel %vm466, %v460, %v477
  %v479 = vsel %vm465, %v476, %v478
  %v480 = vshll.u32 %v440, 8
  %v481 = vmul.u32.u64.compose %v480, %v479
  %v482 = vextract.low.u32 %v481
  %v483 = vextract.high.u32 %v481
  %v484 = vmul.u32.u64.compose %v480, %v475
  %v485 = vextract.low.u32 %v484
  %v486 = vextract.high.u32 %v484
  %v487 = vmul.u32 %v480, %v471
  %v488 = vadd.s32 %v483, %v485
  %vm489 = vc.u32 %v483, %v485
  %v490 = vadd.s32 %v486, 1
  %v491 = vsel %vm489, %v490, %v486
  %v492 = vadd.s32 %v487, %v491
  %v493 = vadd.s32 %v492, 536870912
  %v494 = vshrl.u32 %v493, 30
  %v495 = vshll.u32 %v494, 30
  %v496 = vsub.s32 %v492, %v495
  %vm497 = vcmp.lt.s32.totalorder %v496, 0
  %v498 = vsub.s32 0, %v496
  %v499 = vsel %vm497, %v498, %v496
  %v500 = vclz %v499
  %v501 = vsub.s32 %v500, 2
  %vm502 = vcmp.gt.s32.totalorder 0, %v501
  %v503 = vsel %vm502, 0, %v501
  %v504 = vsub.s32 32, %v503
  %v505 = vshll.u32 %v496, %v503
  %v506 = vshrl.u32 %v488, %v504
  %v507 = vor.u32 %v505, %v506
  %v508 = vsub.s32 4294967266, %v503
  %v509 = vadd.s32 %v508, 127
  %v510 = vshll.u32 %v509, 23
  %v511 = vor.u32 4788187, %v510
  %v512 = vand.u32 2147483647, %v511
  %v514 = vcvt.s32.f32 %v507
  %v515 = vmul.f32 %v514, %v512
  %v516 = vxor.u32 %v515, 2147483648
  %v517 = vsel %vm434, %v516, %v515
  %v518 = vsub.s32 4, %v494
  %v519 = vsel %vm434, %v518, %v494
  %v520 = vsel %vm433, %v8, %v517
  %v521 = vsel %vm433, 0, %v519
  %v522 = vcosq.f32.pop %v520
  %v523 = vsinq.f32.pop %v520
  %vm524 = vweird.f32 %v8
  %v525 = vand.u32 %v521, 3
  %vm526 = vcmp.lt.s32.totalorder %v525, 2
  %vm527 = vcmp.eq.s32.totalorder %v525, 0
  %v528 = vxor.u32 %v523, 2147483648
  %v529 = vsel %vm527, %v522, %v528
  %vm530 = vcmp.eq.s32.totalorder %v525, 2
  %v531 = vxor.u32 %v522, 2147483648
  %v532 = vsel %vm530, %v531, %v523
  %v533 = vsel %vm526, %v529, %v532
  %v534 = vsel %vm524, nan, %v533
  %v535 = vand.u32 2147483647, %v9
  %vm536 = vcmp.le.f32.partialorder %v535, 0.7853982
  %vm537 = vcmp.lt.s32.totalorder %v9, 0
  %v538 = vand.u32 %v9, 2139095040
  %v539 = vshrl.u32 %v538, 23
  %v540 = vsub.s32 %v539, 127
  %v541 = vand.u32 2147483647, %v9
  %v542 = vand.u32 %v541, 8388607
  %v543 = vor.u32 %v542, 8388608
  %v544 = vsub.s32 0, %v543
  %v545 = vadd.s32 %v540, 1
  %vm546 = vcmp.gt.s32.totalorder %v545, 0
  %v547 = vsel %vm546, %v545, 0
  %v548 = vshrl.u32 %v547, 5
  %v549 = vand.u32 %v547, 31
  %v550 = vsub.s32 32, %v549
  %v551 = vshrl.u32 683565275, %v550
  %v552 = vshll.u32 683565275, %v549
  %v553 = vshrl.u32 2475754826, %v550
  %v554 = vor.u32 %v552, %v553
  %v555 = vshll.u32 2475754826, %v549
  %v556 = vshrl.u32 2131351028, %v550
  %v557 = vor.u32 %v555, %v556
  %v558 = vshll.u32 2131351028, %v549
  %v559 = vshrl.u32 2102212464, %v550
  %v560 = vor.u32 %v558, %v559
  %v561 = vshll.u32 2102212464, %v549
  %v562 = vshrl.u32 920167782, %v550
  %v563 = vor.u32 %v561, %v562
  %v564 = vshll.u32 920167782, %v549
  %v565 = vshrl.u32 1326507024, %v550
  %v566 = vor.u32 %v564, %v565
  %vm567 = vcmp.lt.s32.totalorder %v548, 1
  %vm568 = vcmp.lt.s32.totalorder %v548, 2
  %vm569 = vcmp.lt.s32.totalorder %v548, 3
  %vm570 = vcmp.lt.s32.totalorder %v548, 4
  %v571 = vsel %vm567, %v551, %v554
  %v572 = vsel %vm570, %v560, 2102212464
  %v573 = vsel %vm569, %v557, %v572
  %v574 = vsel %vm568, %v571, %v573
  %v575 = vsel %vm567, %v554, %v557
  %v576 = vsel %vm570, %v563, 920167782
  %v577 = vsel %vm569, %v560, %v576
  %v578 = vsel %vm568, %v575, %v577
  %v579 = vsel %vm567, %v557, %v560
  %v580 = vsel %vm570, %v566, 1326507024
  %v581 = vsel %vm569, %v563, %v580
  %v582 = vsel %vm568, %v579, %v581
  %v583 = vshll.u32 %v543, 8
  %v584 = vmul.u32.u64.compose %v583, %v582
  %v585 = vextract.low.u32 %v584
  %v586 = vextract.high.u32 %v584
  %v587 = vmul.u32.u64.compose %v583, %v578
  %v588 = vextract.low.u32 %v587
  %v589 = vextract.high.u32 %v587
  %v590 = vmul.u32 %v583, %v574
  %v591 = vadd.s32 %v586, %v588
  %vm592 = vc.u32 %v586, %v588
  %v593 = vadd.s32 %v589, 1
  %v594 = vsel %vm592, %v593, %v589
  %v595 = vadd.s32 %v590, %v594
  %v596 = vadd.s32 %v595, 536870912
  %v597 = vshrl.u32 %v596, 30
  %v598 = vshll.u32 %v597, 30
  %v599 = vsub.s32 %v595, %v598
  %vm600 = vcmp.lt.s32.totalorder %v599, 0
  %v601 = vsub.s32 0, %v599
  %v602 = vsel %vm600, %v601, %v599
  %v603 = vclz %v602
  %v604 = vsub.s32 %v603, 2
  %vm605 = vcmp.gt.s32.totalorder 0, %v604
  %v606 = vsel %vm605, 0, %v604
  %v607 = vsub.s32 32, %v606
  %v608 = vshll.u32 %v599, %v606
  %v609 = vshrl.u32 %v591, %v607
  %v610 = vor.u32 %v608, %v609
  %v611 = vsub.s32 4294967266, %v606
  %v612 = vadd.s32 %v611, 127
  %v613 = vshll.u32 %v612, 23
  %v614 = vor.u32 4788187, %v613
  %v615 = vand.u32 2147483647, %v614
  %v617 = vcvt.s32.f32 %v610
  %v618 = vmul.f32 %v617, %v615
  %v619 = vxor.u32 %v618, 2147483648
  %v620 = vsel %vm537, %v619, %v618
  %v621 = vsub.s32 4, %v597
  %v622 = vsel %vm537, %v621, %v597
  %v623 = vsel %vm536, %v9, %v620
  %v624 = vsel %vm536, 0, %v622
  %v625 = vcosq.f32.pop %v623
  %v626 = vsinq.f32.pop %v623
  %vm627 = vweird.f32 %v9
  %v628 = vand.u32 %v624, 3
  %vm629 = vcmp.lt.s32.totalorder %v628, 2
  %vm630 = vcmp.eq.s32.totalorder %v628, 0
  %v631 = vxor.u32 %v626, 2147483648
  %v632 = vsel %vm630, %v625, %v631
  %vm633 = vcmp.eq.s32.totalorder %v628, 2
  %v634 = vxor.u32 %v625, 2147483648
  %v635 = vsel %vm633, %v634, %v626
  %v636 = vsel %vm629, %v632, %v635
  %v637 = vsel %vm627, nan, %v636
  %v638 = vand.u32 2147483647, %v10
  %vm639 = vcmp.le.f32.partialorder %v638, 0.7853982
  %vm640 = vcmp.lt.s32.totalorder %v10, 0
  %v641 = vand.u32 %v10, 2139095040
  %v642 = vshrl.u32 %v641, 23
  %v643 = vsub.s32 %v642, 127
  %v644 = vand.u32 2147483647, %v10
  %v645 = vand.u32 %v644, 8388607
  %v646 = vor.u32 %v645, 8388608
  %v647 = vsub.s32 0, %v646
  %v648 = vadd.s32 %v643, 1
  %vm649 = vcmp.gt.s32.totalorder %v648, 0
  %v650 = vsel %vm649, %v648, 0
  %v651 = vshrl.u32 %v650, 5
  %v652 = vand.u32 %v650, 31
  %v653 = vsub.s32 32, %v652
  %v654 = vshrl.u32 683565275, %v653
  %v655 = vshll.u32 683565275, %v652
  %v656 = vshrl.u32 2475754826, %v653
  %v657 = vor.u32 %v655, %v656
  %v658 = vshll.u32 2475754826, %v652
  %v659 = vshrl.u32 2131351028, %v653
  %v660 = vor.u32 %v658, %v659
  %v661 = vshll.u32 2131351028, %v652
  %v662 = vshrl.u32 2102212464, %v653
  %v663 = vor.u32 %v661, %v662
  %v664 = vshll.u32 2102212464, %v652
  %v665 = vshrl.u32 920167782, %v653
  %v666 = vor.u32 %v664, %v665
  %v667 = vshll.u32 920167782, %v652
  %v668 = vshrl.u32 1326507024, %v653
  %v669 = vor.u32 %v667, %v668
  %vm670 = vcmp.lt.s32.totalorder %v651, 1
  %vm671 = vcmp.lt.s32.totalorder %v651, 2
  %vm672 = vcmp.lt.s32.totalorder %v651, 3
  %vm673 = vcmp.lt.s32.totalorder %v651, 4
  %v674 = vsel %vm670, %v654, %v657
  %v675 = vsel %vm673, %v663, 2102212464
  %v676 = vsel %vm672, %v660, %v675
  %v677 = vsel %vm671, %v674, %v676
  %v678 = vsel %vm670, %v657, %v660
  %v679 = vsel %vm673, %v666, 920167782
  %v680 = vsel %vm672, %v663, %v679
  %v681 = vsel %vm671, %v678, %v680
  %v682 = vsel %vm670, %v660, %v663
  %v683 = vsel %vm673, %v669, 1326507024
  %v684 = vsel %vm672, %v666, %v683
  %v685 = vsel %vm671, %v682, %v684
  %v686 = vshll.u32 %v646, 8
  %v687 = vmul.u32.u64.compose %v686, %v685
  %v688 = vextract.low.u32 %v687
  %v689 = vextract.high.u32 %v687
  %v690 = vmul.u32.u64.compose %v686, %v681
  %v691 = vextract.low.u32 %v690
  %v692 = vextract.high.u32 %v690
  %v693 = vmul.u32 %v686, %v677
  %v694 = vadd.s32 %v689, %v691
  %vm695 = vc.u32 %v689, %v691
  %v696 = vadd.s32 %v692, 1
  %v697 = vsel %vm695, %v696, %v692
  %v698 = vadd.s32 %v693, %v697
  %v699 = vadd.s32 %v698, 536870912
  %v700 = vshrl.u32 %v699, 30
  %v701 = vshll.u32 %v700, 30
  %v702 = vsub.s32 %v698, %v701
  %vm703 = vcmp.lt.s32.totalorder %v702, 0
  %v704 = vsub.s32 0, %v702
  %v705 = vsel %vm703, %v704, %v702
  %v706 = vclz %v705
  %v707 = vsub.s32 %v706, 2
  %vm708 = vcmp.gt.s32.totalorder 0, %v707
  %v709 = vsel %vm708, 0, %v707
  %v710 = vsub.s32 32, %v709
  %v711 = vshll.u32 %v702, %v709
  %v712 = vshrl.u32 %v694, %v710
  %v713 = vor.u32 %v711, %v712
  %v714 = vsub.s32 4294967266, %v709
  %v715 = vadd.s32 %v714, 127
  %v716 = vshll.u32 %v715, 23
  %v717 = vor.u32 4788187, %v716
  %v718 = vand.u32 2147483647, %v717
  %v720 = vcvt.s32.f32 %v713
  %v721 = vmul.f32 %v720, %v718
  %v722 = vxor.u32 %v721, 2147483648
  %v723 = vsel %vm640, %v722, %v721
  %v724 = vsub.s32 4, %v700
  %v725 = vsel %vm640, %v724, %v700
  %v726 = vsel %vm639, %v10, %v723
  %v727 = vsel %vm639, 0, %v725
  %v728 = vcosq.f32.pop %v726
  %v729 = vsinq.f32.pop %v726
  %vm730 = vweird.f32 %v10
  %v731 = vand.u32 %v727, 3
  %vm732 = vcmp.lt.s32.totalorder %v731, 2
  %vm733 = vcmp.eq.s32.totalorder %v731, 0
  %v734 = vxor.u32 %v729, 2147483648
  %v735 = vsel %vm733, %v728, %v734
  %vm736 = vcmp.eq.s32.totalorder %v731, 2
  %v737 = vxor.u32 %v728, 2147483648
  %v738 = vsel %vm736, %v737, %v729
  %v739 = vsel %vm732, %v735, %v738
  %v740 = vsel %vm730, nan, %v739
  %v741 = vand.u32 2147483647, %v11
  %vm742 = vcmp.le.f32.partialorder %v741, 0.7853982
  %vm743 = vcmp.lt.s32.totalorder %v11, 0
  %v744 = vand.u32 %v11, 2139095040
  %v745 = vshrl.u32 %v744, 23
  %v746 = vsub.s32 %v745, 127
  %v747 = vand.u32 2147483647, %v11
  %v748 = vand.u32 %v747, 8388607
  %v749 = vor.u32 %v748, 8388608
  %v750 = vsub.s32 0, %v749
  %v751 = vadd.s32 %v746, 1
  %vm752 = vcmp.gt.s32.totalorder %v751, 0
  %v753 = vsel %vm752, %v751, 0
  %v754 = vshrl.u32 %v753, 5
  %v755 = vand.u32 %v753, 31
  %v756 = vsub.s32 32, %v755
  %v757 = vshrl.u32 683565275, %v756
  %v758 = vshll.u32 683565275, %v755
  %v759 = vshrl.u32 2475754826, %v756
  %v760 = vor.u32 %v758, %v759
  %v761 = vshll.u32 2475754826, %v755
  %v762 = vshrl.u32 2131351028, %v756
  %v763 = vor.u32 %v761, %v762
  %v764 = vshll.u32 2131351028, %v755
  %v765 = vshrl.u32 2102212464, %v756
  %v766 = vor.u32 %v764, %v765
  %v767 = vshll.u32 2102212464, %v755
  %v768 = vshrl.u32 920167782, %v756
  %v769 = vor.u32 %v767, %v768
  %v770 = vshll.u32 920167782, %v755
  %v771 = vshrl.u32 1326507024, %v756
  %v772 = vor.u32 %v770, %v771
  %vm773 = vcmp.lt.s32.totalorder %v754, 1
  %vm774 = vcmp.lt.s32.totalorder %v754, 2
  %vm775 = vcmp.lt.s32.totalorder %v754, 3
  %vm776 = vcmp.lt.s32.totalorder %v754, 4
  %v777 = vsel %vm773, %v757, %v760
  %v778 = vsel %vm776, %v766, 2102212464
  %v779 = vsel %vm775, %v763, %v778
  %v780 = vsel %vm774, %v777, %v779
  %v781 = vsel %vm773, %v760, %v763
  %v782 = vsel %vm776, %v769, 920167782
  %v783 = vsel %vm775, %v766, %v782
  %v784 = vsel %vm774, %v781, %v783
  %v785 = vsel %vm773, %v763, %v766
  %v786 = vsel %vm776, %v772, 1326507024
  %v787 = vsel %vm775, %v769, %v786
  %v788 = vsel %vm774, %v785, %v787
  %v789 = vshll.u32 %v749, 8
  %v790 = vmul.u32.u64.compose %v789, %v788
  %v791 = vextract.low.u32 %v790
  %v792 = vextract.high.u32 %v790
  %v793 = vmul.u32.u64.compose %v789, %v784
  %v794 = vextract.low.u32 %v793
  %v795 = vextract.high.u32 %v793
  %v796 = vmul.u32 %v789, %v780
  %v797 = vadd.s32 %v792, %v794
  %vm798 = vc.u32 %v792, %v794
  %v799 = vadd.s32 %v795, 1
  %v800 = vsel %vm798, %v799, %v795
  %v801 = vadd.s32 %v796, %v800
  %v802 = vadd.s32 %v801, 536870912
  %v803 = vshrl.u32 %v802, 30
  %v804 = vshll.u32 %v803, 30
  %v805 = vsub.s32 %v801, %v804
  %vm806 = vcmp.lt.s32.totalorder %v805, 0
  %v807 = vsub.s32 0, %v805
  %v808 = vsel %vm806, %v807, %v805
  %v809 = vclz %v808
  %v810 = vsub.s32 %v809, 2
  %vm811 = vcmp.gt.s32.totalorder 0, %v810
  %v812 = vsel %vm811, 0, %v810
  %v813 = vsub.s32 32, %v812
  %v814 = vshll.u32 %v805, %v812
  %v815 = vshrl.u32 %v797, %v813
  %v816 = vor.u32 %v814, %v815
  %v817 = vsub.s32 4294967266, %v812
  %v818 = vadd.s32 %v817, 127
  %v819 = vshll.u32 %v818, 23
  %v820 = vor.u32 4788187, %v819
  %v821 = vand.u32 2147483647, %v820
  %v823 = vcvt.s32.f32 %v816
  %v824 = vmul.f32 %v823, %v821
  %v825 = vxor.u32 %v824, 2147483648
  %v826 = vsel %vm743, %v825, %v824
  %v827 = vsub.s32 4, %v803
  %v828 = vsel %vm743, %v827, %v803
  %v829 = vsel %vm742, %v11, %v826
  %v830 = vsel %vm742, 0, %v828
  %v831 = vcosq.f32.pop %v829
  %v832 = vsinq.f32.pop %v829
  %vm833 = vweird.f32 %v11
  %v834 = vand.u32 %v830, 3
  %vm835 = vcmp.lt.s32.totalorder %v834, 2
  %vm836 = vcmp.eq.s32.totalorder %v834, 0
  %v837 = vxor.u32 %v832, 2147483648
  %v838 = vsel %vm836, %v831, %v837
  %vm839 = vcmp.eq.s32.totalorder %v834, 2
  %v840 = vxor.u32 %v831, 2147483648
  %v841 = vsel %vm839, %v840, %v832
  %v842 = vsel %vm835, %v838, %v841
  %v843 = vsel %vm833, nan, %v842
  %s844 = scalar_lea.vmem %s1, 32
  %845 = vst [vmem:[%s844] sm:$0xff] %v119
  %846 = vst [vmem:[%s844 + $0x8] sm:$0xff] %v223
  %847 = vst [vmem:[%s844 + $0x10] sm:$0xff] %v327
  %848 = vst [vmem:[%s844 + $0x18] sm:$0xff] %v431
  %s849 = scalar_lea.vmem %s1, 64
  %850 = vst [vmem:[%s849] sm:$0xff] %v534
  %851 = vst [vmem:[%s849 + $0x8] sm:$0xff] %v637
  %852 = vst [vmem:[%s849 + $0x10] sm:$0xff] %v740
  %853 = vst [vmem:[%s849 + $0x18] sm:$0xff] %v843
  %v854 = vmul.f32 %v119, 2.0
  %v855 = vmul.f32 %v223, 2.0
  %v856 = vmul.f32 %v327, 2.0
  %v857 = vmul.f32 %v431, 2.0
  %v858 = vmul.f32 %v854, %v534
  %v859 = vmul.f32 %v855, %v637
  %v860 = vmul.f32 %v856, %v740
  %v861 = vmul.f32 %v857, %v843
  %v862 = vmul.f32 %v534, 2.0
  %v863 = vmul.f32 %v637, 2.0
  %v864 = vmul.f32 %v740, 2.0
  %v865 = vmul.f32 %v843, 2.0
  %v866 = vmul.f32 %v862, %v534
  %v867 = vmul.f32 %v863, %v637
  %v868 = vmul.f32 %v864, %v740
  %v869 = vmul.f32 %v865, %v843
  %v870 = vsub.f32 %v866, 1.0
  %v871 = vsub.f32 %v867, 1.0
  %v872 = vsub.f32 %v868, 1.0
  %v873 = vsub.f32 %v869, 1.0
  %s874 = scalar_lea.vmem %s1, 96
  %875 = vst [vmem:[%s874] sm:$0xff] %v858
  %876 = vst [vmem:[%s874 + $0x8] sm:$0xff] %v859
  %877 = vst [vmem:[%s874 + $0x10] sm:$0xff] %v860
  %878 = vst [vmem:[%s874 + $0x18] sm:$0xff] %v861
  %s879 = scalar_lea.vmem %s1, 128
  %880 = vst [vmem:[%s879] sm:$0xff] %v870
  %881 = vst [vmem:[%s879 + $0x8] sm:$0xff] %v871
  %882 = vst [vmem:[%s879 + $0x10] sm:$0xff] %v872
  %883 = vst [vmem:[%s879 + $0x18] sm:$0xff] %v873
  %v884 = vmul.f32 %v858, 2.0
  %v885 = vmul.f32 %v859, 2.0
  %v886 = vmul.f32 %v860, 2.0
  %v887 = vmul.f32 %v861, 2.0
  %v888 = vmul.f32 %v884, %v870
  %v889 = vmul.f32 %v885, %v871
  %v890 = vmul.f32 %v886, %v872
  %v891 = vmul.f32 %v887, %v873
  %v892 = vmul.f32 %v870, 2.0
  %v893 = vmul.f32 %v871, 2.0
  %v894 = vmul.f32 %v872, 2.0
  %v895 = vmul.f32 %v873, 2.0
  %v896 = vmul.f32 %v892, %v870
  %v897 = vmul.f32 %v893, %v871
  %v898 = vmul.f32 %v894, %v872
  %v899 = vmul.f32 %v895, %v873
  %v900 = vsub.f32 %v896, 1.0
  %v901 = vsub.f32 %v897, 1.0
  %v902 = vsub.f32 %v898, 1.0
  %v903 = vsub.f32 %v899, 1.0
  %s904 = scalar_lea.vmem %s1, 160
  %905 = vst [vmem:[%s904] sm:$0xff] %v888
  %906 = vst [vmem:[%s904 + $0x8] sm:$0xff] %v889
  %907 = vst [vmem:[%s904 + $0x10] sm:$0xff] %v890
  %908 = vst [vmem:[%s904 + $0x18] sm:$0xff] %v891
  %s909 = scalar_lea.vmem %s1, 192
  %910 = vst [vmem:[%s909] sm:$0xff] %v900
  %911 = vst [vmem:[%s909 + $0x8] sm:$0xff] %v901
  %912 = vst [vmem:[%s909 + $0x10] sm:$0xff] %v902
  %913 = vst [vmem:[%s909 + $0x18] sm:$0xff] %v903
  %v914 = vmul.f32 %v8, 8.0
  %v915 = vmul.f32 %v9, 8.0
  %v916 = vmul.f32 %v10, 8.0
  %v917 = vmul.f32 %v11, 8.0
  %v918 = vand.u32 2147483647, %v914
  %vm919 = vcmp.le.f32.partialorder %v918, 0.7853982
  %vm920 = vcmp.lt.s32.totalorder %v914, 0
  %v921 = vand.u32 %v914, 2139095040
  %v922 = vshrl.u32 %v921, 23
  %v923 = vsub.s32 %v922, 127
  %v924 = vand.u32 2147483647, %v914
  %v925 = vand.u32 %v924, 8388607
  %v926 = vor.u32 %v925, 8388608
  %v927 = vsub.s32 0, %v926
  %v928 = vadd.s32 %v923, 1
  %vm929 = vcmp.gt.s32.totalorder %v928, 0
  %v930 = vsel %vm929, %v928, 0
  %v931 = vshrl.u32 %v930, 5
  %v932 = vand.u32 %v930, 31
  %v933 = vsub.s32 32, %v932
  %v934 = vshrl.u32 683565275, %v933
  %v935 = vshll.u32 683565275, %v932
  %v936 = vshrl.u32 2475754826, %v933
  %v937 = vor.u32 %v935, %v936
  %v938 = vshll.u32 2475754826, %v932
  %v939 = vshrl.u32 2131351028, %v933
  %v940 = vor.u32 %v938, %v939
  %v941 = vshll.u32 2131351028, %v932
  %v942 = vshrl.u32 2102212464, %v933
  %v943 = vor.u32 %v941, %v942
  %v944 = vshll.u32 2102212464, %v932
  %v945 = vshrl.u32 920167782, %v933
  %v946 = vor.u32 %v944, %v945
  %v947 = vshll.u32 920167782, %v932
  %v948 = vshrl.u32 1326507024, %v933
  %v949 = vor.u32 %v947, %v948
  %vm950 = vcmp.lt.s32.totalorder %v931, 1
  %vm951 = vcmp.lt.s32.totalorder %v931, 2
  %vm952 = vcmp.lt.s32.totalorder %v931, 3
  %vm953 = vcmp.lt.s32.totalorder %v931, 4
  %v954 = vsel %vm950, %v934, %v937
  %v955 = vsel %vm953, %v943, 2102212464
  %v956 = vsel %vm952, %v940, %v955
  %v957 = vsel %vm951, %v954, %v956
  %v958 = vsel %vm950, %v937, %v940
  %v959 = vsel %vm953, %v946, 920167782
  %v960 = vsel %vm952, %v943, %v959
  %v961 = vsel %vm951, %v958, %v960
  %v962 = vsel %vm950, %v940, %v943
  %v963 = vsel %vm953, %v949, 1326507024
  %v964 = vsel %vm952, %v946, %v963
  %v965 = vsel %vm951, %v962, %v964
  %v966 = vshll.u32 %v926, 8
  %v967 = vmul.u32.u64.compose %v966, %v965
  %v968 = vextract.low.u32 %v967
  %v969 = vextract.high.u32 %v967
  %v970 = vmul.u32.u64.compose %v966, %v961
  %v971 = vextract.low.u32 %v970
  %v972 = vextract.high.u32 %v970
  %v973 = vmul.u32 %v966, %v957
  %v974 = vadd.s32 %v969, %v971
  %vm975 = vc.u32 %v969, %v971
  %v976 = vadd.s32 %v972, 1
  %v977 = vsel %vm975, %v976, %v972
  %v978 = vadd.s32 %v973, %v977
  %v979 = vadd.s32 %v978, 536870912
  %v980 = vshrl.u32 %v979, 30
  %v981 = vshll.u32 %v980, 30
  %v982 = vsub.s32 %v978, %v981
  %vm983 = vcmp.lt.s32.totalorder %v982, 0
  %v984 = vsub.s32 0, %v982
  %v985 = vsel %vm983, %v984, %v982
  %v986 = vclz %v985
  %v987 = vsub.s32 %v986, 2
  %vm988 = vcmp.gt.s32.totalorder 0, %v987
  %v989 = vsel %vm988, 0, %v987
  %v990 = vsub.s32 32, %v989
  %v991 = vshll.u32 %v982, %v989
  %v992 = vshrl.u32 %v974, %v990
  %v993 = vor.u32 %v991, %v992
  %v994 = vsub.s32 4294967266, %v989
  %v995 = vadd.s32 %v994, 127
  %v996 = vshll.u32 %v995, 23
  %v997 = vor.u32 4788187, %v996
  %v998 = vand.u32 2147483647, %v997
  %v1000 = vcvt.s32.f32 %v993
  %v1001 = vmul.f32 %v1000, %v998
  %v1002 = vxor.u32 %v1001, 2147483648
  %v1003 = vsel %vm920, %v1002, %v1001
  %v1004 = vsub.s32 4, %v980
  %v1005 = vsel %vm920, %v1004, %v980
  %v1006 = vsel %vm919, %v914, %v1003
  %v1007 = vsel %vm919, 0, %v1005
  %v1008 = vcosq.f32.pop %v1006
  %v1009 = vsinq.f32.pop %v1006
  %vm1010 = vweird.f32 %v914
  %v1011 = vadd.s32 %v1007, 3
  %v1012 = vand.u32 %v1011, 3
  %vm1013 = vcmp.lt.s32.totalorder %v1012, 2
  %vm1014 = vcmp.eq.s32.totalorder %v1012, 0
  %v1015 = vxor.u32 %v1009, 2147483648
  %v1016 = vsel %vm1014, %v1008, %v1015
  %vm1017 = vcmp.eq.s32.totalorder %v1012, 2
  %v1018 = vxor.u32 %v1008, 2147483648
  %v1019 = vsel %vm1017, %v1018, %v1009
  %v1020 = vsel %vm1013, %v1016, %v1019
  %v1021 = vsel %vm1010, nan, %v1020
  %v1022 = vand.u32 2147483647, %v915
  %vm1023 = vcmp.le.f32.partialorder %v1022, 0.7853982
  %vm1024 = vcmp.lt.s32.totalorder %v915, 0
  %v1025 = vand.u32 %v915, 2139095040
  %v1026 = vshrl.u32 %v1025, 23
  %v1027 = vsub.s32 %v1026, 127
  %v1028 = vand.u32 2147483647, %v915
  %v1029 = vand.u32 %v1028, 8388607
  %v1030 = vor.u32 %v1029, 8388608
  %v1031 = vsub.s32 0, %v1030
  %v1032 = vadd.s32 %v1027, 1
  %vm1033 = vcmp.gt.s32.totalorder %v1032, 0
  %v1034 = vsel %vm1033, %v1032, 0
  %v1035 = vshrl.u32 %v1034, 5
  %v1036 = vand.u32 %v1034, 31
  %v1037 = vsub.s32 32, %v1036
  %v1038 = vshrl.u32 683565275, %v1037
  %v1039 = vshll.u32 683565275, %v1036
  %v1040 = vshrl.u32 2475754826, %v1037
  %v1041 = vor.u32 %v1039, %v1040
  %v1042 = vshll.u32 2475754826, %v1036
  %v1043 = vshrl.u32 2131351028, %v1037
  %v1044 = vor.u32 %v1042, %v1043
  %v1045 = vshll.u32 2131351028, %v1036
  %v1046 = vshrl.u32 2102212464, %v1037
  %v1047 = vor.u32 %v1045, %v1046
  %v1048 = vshll.u32 2102212464, %v1036
  %v1049 = vshrl.u32 920167782, %v1037
  %v1050 = vor.u32 %v1048, %v1049
  %v1051 = vshll.u32 920167782, %v1036
  %v1052 = vshrl.u32 1326507024, %v1037
  %v1053 = vor.u32 %v1051, %v1052
  %vm1054 = vcmp.lt.s32.totalorder %v1035, 1
  %vm1055 = vcmp.lt.s32.totalorder %v1035, 2
  %vm1056 = vcmp.lt.s32.totalorder %v1035, 3
  %vm1057 = vcmp.lt.s32.totalorder %v1035, 4
  %v1058 = vsel %vm1054, %v1038, %v1041
  %v1059 = vsel %vm1057, %v1047, 2102212464
  %v1060 = vsel %vm1056, %v1044, %v1059
  %v1061 = vsel %vm1055, %v1058, %v1060
  %v1062 = vsel %vm1054, %v1041, %v1044
  %v1063 = vsel %vm1057, %v1050, 920167782
  %v1064 = vsel %vm1056, %v1047, %v1063
  %v1065 = vsel %vm1055, %v1062, %v1064
  %v1066 = vsel %vm1054, %v1044, %v1047
  %v1067 = vsel %vm1057, %v1053, 1326507024
  %v1068 = vsel %vm1056, %v1050, %v1067
  %v1069 = vsel %vm1055, %v1066, %v1068
  %v1070 = vshll.u32 %v1030, 8
  %v1071 = vmul.u32.u64.compose %v1070, %v1069
  %v1072 = vextract.low.u32 %v1071
  %v1073 = vextract.high.u32 %v1071
  %v1074 = vmul.u32.u64.compose %v1070, %v1065
  %v1075 = vextract.low.u32 %v1074
  %v1076 = vextract.high.u32 %v1074
  %v1077 = vmul.u32 %v1070, %v1061
  %v1078 = vadd.s32 %v1073, %v1075
  %vm1079 = vc.u32 %v1073, %v1075
  %v1080 = vadd.s32 %v1076, 1
  %v1081 = vsel %vm1079, %v1080, %v1076
  %v1082 = vadd.s32 %v1077, %v1081
  %v1083 = vadd.s32 %v1082, 536870912
  %v1084 = vshrl.u32 %v1083, 30
  %v1085 = vshll.u32 %v1084, 30
  %v1086 = vsub.s32 %v1082, %v1085
  %vm1087 = vcmp.lt.s32.totalorder %v1086, 0
  %v1088 = vsub.s32 0, %v1086
  %v1089 = vsel %vm1087, %v1088, %v1086
  %v1090 = vclz %v1089
  %v1091 = vsub.s32 %v1090, 2
  %vm1092 = vcmp.gt.s32.totalorder 0, %v1091
  %v1093 = vsel %vm1092, 0, %v1091
  %v1094 = vsub.s32 32, %v1093
  %v1095 = vshll.u32 %v1086, %v1093
  %v1096 = vshrl.u32 %v1078, %v1094
  %v1097 = vor.u32 %v1095, %v1096
  %v1098 = vsub.s32 4294967266, %v1093
  %v1099 = vadd.s32 %v1098, 127
  %v1100 = vshll.u32 %v1099, 23
  %v1101 = vor.u32 4788187, %v1100
  %v1102 = vand.u32 2147483647, %v1101
  %v1104 = vcvt.s32.f32 %v1097
  %v1105 = vmul.f32 %v1104, %v1102
  %v1106 = vxor.u32 %v1105, 2147483648
  %v1107 = vsel %vm1024, %v1106, %v1105
  %v1108 = vsub.s32 4, %v1084
  %v1109 = vsel %vm1024, %v1108, %v1084
  %v1110 = vsel %vm1023, %v915, %v1107
  %v1111 = vsel %vm1023, 0, %v1109
  %v1112 = vcosq.f32.pop %v1110
  %v1113 = vsinq.f32.pop %v1110
  %vm1114 = vweird.f32 %v915
  %v1115 = vadd.s32 %v1111, 3
  %v1116 = vand.u32 %v1115, 3
  %vm1117 = vcmp.lt.s32.totalorder %v1116, 2
  %vm1118 = vcmp.eq.s32.totalorder %v1116, 0
  %v1119 = vxor.u32 %v1113, 2147483648
  %v1120 = vsel %vm1118, %v1112, %v1119
  %vm1121 = vcmp.eq.s32.totalorder %v1116, 2
  %v1122 = vxor.u32 %v1112, 2147483648
  %v1123 = vsel %vm1121, %v1122, %v1113
  %v1124 = vsel %vm1117, %v1120, %v1123
  %v1125 = vsel %vm1114, nan, %v1124
  %v1126 = vand.u32 2147483647, %v916
  %vm1127 = vcmp.le.f32.partialorder %v1126, 0.7853982
  %vm1128 = vcmp.lt.s32.totalorder %v916, 0
  %v1129 = vand.u32 %v916, 2139095040
  %v1130 = vshrl.u32 %v1129, 23
  %v1131 = vsub.s32 %v1130, 127
  %v1132 = vand.u32 2147483647, %v916
  %v1133 = vand.u32 %v1132, 8388607
  %v1134 = vor.u32 %v1133, 8388608
  %v1135 = vsub.s32 0, %v1134
  %v1136 = vadd.s32 %v1131, 1
  %vm1137 = vcmp.gt.s32.totalorder %v1136, 0
  %v1138 = vsel %vm1137, %v1136, 0
  %v1139 = vshrl.u32 %v1138, 5
  %v1140 = vand.u32 %v1138, 31
  %v1141 = vsub.s32 32, %v1140
  %v1142 = vshrl.u32 683565275, %v1141
  %v1143 = vshll.u32 683565275, %v1140
  %v1144 = vshrl.u32 2475754826, %v1141
  %v1145 = vor.u32 %v1143, %v1144
  %v1146 = vshll.u32 2475754826, %v1140
  %v1147 = vshrl.u32 2131351028, %v1141
  %v1148 = vor.u32 %v1146, %v1147
  %v1149 = vshll.u32 2131351028, %v1140
  %v1150 = vshrl.u32 2102212464, %v1141
  %v1151 = vor.u32 %v1149, %v1150
  %v1152 = vshll.u32 2102212464, %v1140
  %v1153 = vshrl.u32 920167782, %v1141
  %v1154 = vor.u32 %v1152, %v1153
  %v1155 = vshll.u32 920167782, %v1140
  %v1156 = vshrl.u32 1326507024, %v1141
  %v1157 = vor.u32 %v1155, %v1156
  %vm1158 = vcmp.lt.s32.totalorder %v1139, 1
  %vm1159 = vcmp.lt.s32.totalorder %v1139, 2
  %vm1160 = vcmp.lt.s32.totalorder %v1139, 3
  %vm1161 = vcmp.lt.s32.totalorder %v1139, 4
  %v1162 = vsel %vm1158, %v1142, %v1145
  %v1163 = vsel %vm1161, %v1151, 2102212464
  %v1164 = vsel %vm1160, %v1148, %v1163
  %v1165 = vsel %vm1159, %v1162, %v1164
  %v1166 = vsel %vm1158, %v1145, %v1148
  %v1167 = vsel %vm1161, %v1154, 920167782
  %v1168 = vsel %vm1160, %v1151, %v1167
  %v1169 = vsel %vm1159, %v1166, %v1168
  %v1170 = vsel %vm1158, %v1148, %v1151
  %v1171 = vsel %vm1161, %v1157, 1326507024
  %v1172 = vsel %vm1160, %v1154, %v1171
  %v1173 = vsel %vm1159, %v1170, %v1172
  %v1174 = vshll.u32 %v1134, 8
  %v1175 = vmul.u32.u64.compose %v1174, %v1173
  %v1176 = vextract.low.u32 %v1175
  %v1177 = vextract.high.u32 %v1175
  %v1178 = vmul.u32.u64.compose %v1174, %v1169
  %v1179 = vextract.low.u32 %v1178
  %v1180 = vextract.high.u32 %v1178
  %v1181 = vmul.u32 %v1174, %v1165
  %v1182 = vadd.s32 %v1177, %v1179
  %vm1183 = vc.u32 %v1177, %v1179
  %v1184 = vadd.s32 %v1180, 1
  %v1185 = vsel %vm1183, %v1184, %v1180
  %v1186 = vadd.s32 %v1181, %v1185
  %v1187 = vadd.s32 %v1186, 536870912
  %v1188 = vshrl.u32 %v1187, 30
  %v1189 = vshll.u32 %v1188, 30
  %v1190 = vsub.s32 %v1186, %v1189
  %vm1191 = vcmp.lt.s32.totalorder %v1190, 0
  %v1192 = vsub.s32 0, %v1190
  %v1193 = vsel %vm1191, %v1192, %v1190
  %v1194 = vclz %v1193
  %v1195 = vsub.s32 %v1194, 2
  %vm1196 = vcmp.gt.s32.totalorder 0, %v1195
  %v1197 = vsel %vm1196, 0, %v1195
  %v1198 = vsub.s32 32, %v1197
  %v1199 = vshll.u32 %v1190, %v1197
  %v1200 = vshrl.u32 %v1182, %v1198
  %v1201 = vor.u32 %v1199, %v1200
  %v1202 = vsub.s32 4294967266, %v1197
  %v1203 = vadd.s32 %v1202, 127
  %v1204 = vshll.u32 %v1203, 23
  %v1205 = vor.u32 4788187, %v1204
  %v1206 = vand.u32 2147483647, %v1205
  %v1208 = vcvt.s32.f32 %v1201
  %v1209 = vmul.f32 %v1208, %v1206
  %v1210 = vxor.u32 %v1209, 2147483648
  %v1211 = vsel %vm1128, %v1210, %v1209
  %v1212 = vsub.s32 4, %v1188
  %v1213 = vsel %vm1128, %v1212, %v1188
  %v1214 = vsel %vm1127, %v916, %v1211
  %v1215 = vsel %vm1127, 0, %v1213
  %v1216 = vcosq.f32.pop %v1214
  %v1217 = vsinq.f32.pop %v1214
  %vm1218 = vweird.f32 %v916
  %v1219 = vadd.s32 %v1215, 3
  %v1220 = vand.u32 %v1219, 3
  %vm1221 = vcmp.lt.s32.totalorder %v1220, 2
  %vm1222 = vcmp.eq.s32.totalorder %v1220, 0
  %v1223 = vxor.u32 %v1217, 2147483648
  %v1224 = vsel %vm1222, %v1216, %v1223
  %vm1225 = vcmp.eq.s32.totalorder %v1220, 2
  %v1226 = vxor.u32 %v1216, 2147483648
  %v1227 = vsel %vm1225, %v1226, %v1217
  %v1228 = vsel %vm1221, %v1224, %v1227
  %v1229 = vsel %vm1218, nan, %v1228
  %v1230 = vand.u32 2147483647, %v917
  %vm1231 = vcmp.le.f32.partialorder %v1230, 0.7853982
  %vm1232 = vcmp.lt.s32.totalorder %v917, 0
  %v1233 = vand.u32 %v917, 2139095040
  %v1234 = vshrl.u32 %v1233, 23
  %v1235 = vsub.s32 %v1234, 127
  %v1236 = vand.u32 2147483647, %v917
  %v1237 = vand.u32 %v1236, 8388607
  %v1238 = vor.u32 %v1237, 8388608
  %v1239 = vsub.s32 0, %v1238
  %v1240 = vadd.s32 %v1235, 1
  %vm1241 = vcmp.gt.s32.totalorder %v1240, 0
  %v1242 = vsel %vm1241, %v1240, 0
  %v1243 = vshrl.u32 %v1242, 5
  %v1244 = vand.u32 %v1242, 31
  %v1245 = vsub.s32 32, %v1244
  %v1246 = vshrl.u32 683565275, %v1245
  %v1247 = vshll.u32 683565275, %v1244
  %v1248 = vshrl.u32 2475754826, %v1245
  %v1249 = vor.u32 %v1247, %v1248
  %v1250 = vshll.u32 2475754826, %v1244
  %v1251 = vshrl.u32 2131351028, %v1245
  %v1252 = vor.u32 %v1250, %v1251
  %v1253 = vshll.u32 2131351028, %v1244
  %v1254 = vshrl.u32 2102212464, %v1245
  %v1255 = vor.u32 %v1253, %v1254
  %v1256 = vshll.u32 2102212464, %v1244
  %v1257 = vshrl.u32 920167782, %v1245
  %v1258 = vor.u32 %v1256, %v1257
  %v1259 = vshll.u32 920167782, %v1244
  %v1260 = vshrl.u32 1326507024, %v1245
  %v1261 = vor.u32 %v1259, %v1260
  %vm1262 = vcmp.lt.s32.totalorder %v1243, 1
  %vm1263 = vcmp.lt.s32.totalorder %v1243, 2
  %vm1264 = vcmp.lt.s32.totalorder %v1243, 3
  %vm1265 = vcmp.lt.s32.totalorder %v1243, 4
  %v1266 = vsel %vm1262, %v1246, %v1249
  %v1267 = vsel %vm1265, %v1255, 2102212464
  %v1268 = vsel %vm1264, %v1252, %v1267
  %v1269 = vsel %vm1263, %v1266, %v1268
  %v1270 = vsel %vm1262, %v1249, %v1252
  %v1271 = vsel %vm1265, %v1258, 920167782
  %v1272 = vsel %vm1264, %v1255, %v1271
  %v1273 = vsel %vm1263, %v1270, %v1272
  %v1274 = vsel %vm1262, %v1252, %v1255
  %v1275 = vsel %vm1265, %v1261, 1326507024
  %v1276 = vsel %vm1264, %v1258, %v1275
  %v1277 = vsel %vm1263, %v1274, %v1276
  %v1278 = vshll.u32 %v1238, 8
  %v1279 = vmul.u32.u64.compose %v1278, %v1277
  %v1280 = vextract.low.u32 %v1279
  %v1281 = vextract.high.u32 %v1279
  %v1282 = vmul.u32.u64.compose %v1278, %v1273
  %v1283 = vextract.low.u32 %v1282
  %v1284 = vextract.high.u32 %v1282
  %v1285 = vmul.u32 %v1278, %v1269
  %v1286 = vadd.s32 %v1281, %v1283
  %vm1287 = vc.u32 %v1281, %v1283
  %v1288 = vadd.s32 %v1284, 1
  %v1289 = vsel %vm1287, %v1288, %v1284
  %v1290 = vadd.s32 %v1285, %v1289
  %v1291 = vadd.s32 %v1290, 536870912
  %v1292 = vshrl.u32 %v1291, 30
  %v1293 = vshll.u32 %v1292, 30
  %v1294 = vsub.s32 %v1290, %v1293
  %vm1295 = vcmp.lt.s32.totalorder %v1294, 0
  %v1296 = vsub.s32 0, %v1294
  %v1297 = vsel %vm1295, %v1296, %v1294
  %v1298 = vclz %v1297
  %v1299 = vsub.s32 %v1298, 2
  %vm1300 = vcmp.gt.s32.totalorder 0, %v1299
  %v1301 = vsel %vm1300, 0, %v1299
  %v1302 = vsub.s32 32, %v1301
  %v1303 = vshll.u32 %v1294, %v1301
  %v1304 = vshrl.u32 %v1286, %v1302
  %v1305 = vor.u32 %v1303, %v1304
  %v1306 = vsub.s32 4294967266, %v1301
  %v1307 = vadd.s32 %v1306, 127
  %v1308 = vshll.u32 %v1307, 23
  %v1309 = vor.u32 4788187, %v1308
  %v1310 = vand.u32 2147483647, %v1309
  %v1312 = vcvt.s32.f32 %v1305
  %v1313 = vmul.f32 %v1312, %v1310
  %v1314 = vxor.u32 %v1313, 2147483648
  %v1315 = vsel %vm1232, %v1314, %v1313
  %v1316 = vsub.s32 4, %v1292
  %v1317 = vsel %vm1232, %v1316, %v1292
  %v1318 = vsel %vm1231, %v917, %v1315
  %v1319 = vsel %vm1231, 0, %v1317
  %v1320 = vcosq.f32.pop %v1318
  %v1321 = vsinq.f32.pop %v1318
  %vm1322 = vweird.f32 %v917
  %v1323 = vadd.s32 %v1319, 3
  %v1324 = vand.u32 %v1323, 3
  %vm1325 = vcmp.lt.s32.totalorder %v1324, 2
  %vm1326 = vcmp.eq.s32.totalorder %v1324, 0
  %v1327 = vxor.u32 %v1321, 2147483648
  %v1328 = vsel %vm1326, %v1320, %v1327
  %vm1329 = vcmp.eq.s32.totalorder %v1324, 2
  %v1330 = vxor.u32 %v1320, 2147483648
  %v1331 = vsel %vm1329, %v1330, %v1321
  %v1332 = vsel %vm1325, %v1328, %v1331
  %v1333 = vsel %vm1322, nan, %v1332
  %v1334 = vand.u32 2147483647, %v914
  %vm1335 = vcmp.le.f32.partialorder %v1334, 0.7853982
  %vm1336 = vcmp.lt.s32.totalorder %v914, 0
  %v1337 = vand.u32 %v914, 2139095040
  %v1338 = vshrl.u32 %v1337, 23
  %v1339 = vsub.s32 %v1338, 127
  %v1340 = vand.u32 2147483647, %v914
  %v1341 = vand.u32 %v1340, 8388607
  %v1342 = vor.u32 %v1341, 8388608
  %v1343 = vsub.s32 0, %v1342
  %v1344 = vadd.s32 %v1339, 1
  %vm1345 = vcmp.gt.s32.totalorder %v1344, 0
  %v1346 = vsel %vm1345, %v1344, 0
  %v1347 = vshrl.u32 %v1346, 5
  %v1348 = vand.u32 %v1346, 31
  %v1349 = vsub.s32 32, %v1348
  %v1350 = vshrl.u32 683565275, %v1349
  %v1351 = vshll.u32 683565275, %v1348
  %v1352 = vshrl.u32 2475754826, %v1349
  %v1353 = vor.u32 %v1351, %v1352
  %v1354 = vshll.u32 2475754826, %v1348
  %v1355 = vshrl.u32 2131351028, %v1349
  %v1356 = vor.u32 %v1354, %v1355
  %v1357 = vshll.u32 2131351028, %v1348
  %v1358 = vshrl.u32 2102212464, %v1349
  %v1359 = vor.u32 %v1357, %v1358
  %v1360 = vshll.u32 2102212464, %v1348
  %v1361 = vshrl.u32 920167782, %v1349
  %v1362 = vor.u32 %v1360, %v1361
  %v1363 = vshll.u32 920167782, %v1348
  %v1364 = vshrl.u32 1326507024, %v1349
  %v1365 = vor.u32 %v1363, %v1364
  %vm1366 = vcmp.lt.s32.totalorder %v1347, 1
  %vm1367 = vcmp.lt.s32.totalorder %v1347, 2
  %vm1368 = vcmp.lt.s32.totalorder %v1347, 3
  %vm1369 = vcmp.lt.s32.totalorder %v1347, 4
  %v1370 = vsel %vm1366, %v1350, %v1353
  %v1371 = vsel %vm1369, %v1359, 2102212464
  %v1372 = vsel %vm1368, %v1356, %v1371
  %v1373 = vsel %vm1367, %v1370, %v1372
  %v1374 = vsel %vm1366, %v1353, %v1356
  %v1375 = vsel %vm1369, %v1362, 920167782
  %v1376 = vsel %vm1368, %v1359, %v1375
  %v1377 = vsel %vm1367, %v1374, %v1376
  %v1378 = vsel %vm1366, %v1356, %v1359
  %v1379 = vsel %vm1369, %v1365, 1326507024
  %v1380 = vsel %vm1368, %v1362, %v1379
  %v1381 = vsel %vm1367, %v1378, %v1380
  %v1382 = vshll.u32 %v1342, 8
  %v1383 = vmul.u32.u64.compose %v1382, %v1381
  %v1384 = vextract.low.u32 %v1383
  %v1385 = vextract.high.u32 %v1383
  %v1386 = vmul.u32.u64.compose %v1382, %v1377
  %v1387 = vextract.low.u32 %v1386
  %v1388 = vextract.high.u32 %v1386
  %v1389 = vmul.u32 %v1382, %v1373
  %v1390 = vadd.s32 %v1385, %v1387
  %vm1391 = vc.u32 %v1385, %v1387
  %v1392 = vadd.s32 %v1388, 1
  %v1393 = vsel %vm1391, %v1392, %v1388
  %v1394 = vadd.s32 %v1389, %v1393
  %v1395 = vadd.s32 %v1394, 536870912
  %v1396 = vshrl.u32 %v1395, 30
  %v1397 = vshll.u32 %v1396, 30
  %v1398 = vsub.s32 %v1394, %v1397
  %vm1399 = vcmp.lt.s32.totalorder %v1398, 0
  %v1400 = vsub.s32 0, %v1398
  %v1401 = vsel %vm1399, %v1400, %v1398
  %v1402 = vclz %v1401
  %v1403 = vsub.s32 %v1402, 2
  %vm1404 = vcmp.gt.s32.totalorder 0, %v1403
  %v1405 = vsel %vm1404, 0, %v1403
  %v1406 = vsub.s32 32, %v1405
  %v1407 = vshll.u32 %v1398, %v1405
  %v1408 = vshrl.u32 %v1390, %v1406
  %v1409 = vor.u32 %v1407, %v1408
  %v1410 = vsub.s32 4294967266, %v1405
  %v1411 = vadd.s32 %v1410, 127
  %v1412 = vshll.u32 %v1411, 23
  %v1413 = vor.u32 4788187, %v1412
  %v1414 = vand.u32 2147483647, %v1413
  %v1416 = vcvt.s32.f32 %v1409
  %v1417 = vmul.f32 %v1416, %v1414
  %v1418 = vxor.u32 %v1417, 2147483648
  %v1419 = vsel %vm1336, %v1418, %v1417
  %v1420 = vsub.s32 4, %v1396
  %v1421 = vsel %vm1336, %v1420, %v1396
  %v1422 = vsel %vm1335, %v914, %v1419
  %v1423 = vsel %vm1335, 0, %v1421
  %v1424 = vcosq.f32.pop %v1422
  %v1425 = vsinq.f32.pop %v1422
  %vm1426 = vweird.f32 %v914
  %v1427 = vand.u32 %v1423, 3
  %vm1428 = vcmp.lt.s32.totalorder %v1427, 2
  %vm1429 = vcmp.eq.s32.totalorder %v1427, 0
  %v1430 = vxor.u32 %v1425, 2147483648
  %v1431 = vsel %vm1429, %v1424, %v1430
  %vm1432 = vcmp.eq.s32.totalorder %v1427, 2
  %v1433 = vxor.u32 %v1424, 2147483648
  %v1434 = vsel %vm1432, %v1433, %v1425
  %v1435 = vsel %vm1428, %v1431, %v1434
  %v1436 = vsel %vm1426, nan, %v1435
  %v1437 = vand.u32 2147483647, %v915
  %vm1438 = vcmp.le.f32.partialorder %v1437, 0.7853982
  %vm1439 = vcmp.lt.s32.totalorder %v915, 0
  %v1440 = vand.u32 %v915, 2139095040
  %v1441 = vshrl.u32 %v1440, 23
  %v1442 = vsub.s32 %v1441, 127
  %v1443 = vand.u32 2147483647, %v915
  %v1444 = vand.u32 %v1443, 8388607
  %v1445 = vor.u32 %v1444, 8388608
  %v1446 = vsub.s32 0, %v1445
  %v1447 = vadd.s32 %v1442, 1
  %vm1448 = vcmp.gt.s32.totalorder %v1447, 0
  %v1449 = vsel %vm1448, %v1447, 0
  %v1450 = vshrl.u32 %v1449, 5
  %v1451 = vand.u32 %v1449, 31
  %v1452 = vsub.s32 32, %v1451
  %v1453 = vshrl.u32 683565275, %v1452
  %v1454 = vshll.u32 683565275, %v1451
  %v1455 = vshrl.u32 2475754826, %v1452
  %v1456 = vor.u32 %v1454, %v1455
  %v1457 = vshll.u32 2475754826, %v1451
  %v1458 = vshrl.u32 2131351028, %v1452
  %v1459 = vor.u32 %v1457, %v1458
  %v1460 = vshll.u32 2131351028, %v1451
  %v1461 = vshrl.u32 2102212464, %v1452
  %v1462 = vor.u32 %v1460, %v1461
  %v1463 = vshll.u32 2102212464, %v1451
  %v1464 = vshrl.u32 920167782, %v1452
  %v1465 = vor.u32 %v1463, %v1464
  %v1466 = vshll.u32 920167782, %v1451
  %v1467 = vshrl.u32 1326507024, %v1452
  %v1468 = vor.u32 %v1466, %v1467
  %vm1469 = vcmp.lt.s32.totalorder %v1450, 1
  %vm1470 = vcmp.lt.s32.totalorder %v1450, 2
  %vm1471 = vcmp.lt.s32.totalorder %v1450, 3
  %vm1472 = vcmp.lt.s32.totalorder %v1450, 4
  %v1473 = vsel %vm1469, %v1453, %v1456
  %v1474 = vsel %vm1472, %v1462, 2102212464
  %v1475 = vsel %vm1471, %v1459, %v1474
  %v1476 = vsel %vm1470, %v1473, %v1475
  %v1477 = vsel %vm1469, %v1456, %v1459
  %v1478 = vsel %vm1472, %v1465, 920167782
  %v1479 = vsel %vm1471, %v1462, %v1478
  %v1480 = vsel %vm1470, %v1477, %v1479
  %v1481 = vsel %vm1469, %v1459, %v1462
  %v1482 = vsel %vm1472, %v1468, 1326507024
  %v1483 = vsel %vm1471, %v1465, %v1482
  %v1484 = vsel %vm1470, %v1481, %v1483
  %v1485 = vshll.u32 %v1445, 8
  %v1486 = vmul.u32.u64.compose %v1485, %v1484
  %v1487 = vextract.low.u32 %v1486
  %v1488 = vextract.high.u32 %v1486
  %v1489 = vmul.u32.u64.compose %v1485, %v1480
  %v1490 = vextract.low.u32 %v1489
  %v1491 = vextract.high.u32 %v1489
  %v1492 = vmul.u32 %v1485, %v1476
  %v1493 = vadd.s32 %v1488, %v1490
  %vm1494 = vc.u32 %v1488, %v1490
  %v1495 = vadd.s32 %v1491, 1
  %v1496 = vsel %vm1494, %v1495, %v1491
  %v1497 = vadd.s32 %v1492, %v1496
  %v1498 = vadd.s32 %v1497, 536870912
  %v1499 = vshrl.u32 %v1498, 30
  %v1500 = vshll.u32 %v1499, 30
  %v1501 = vsub.s32 %v1497, %v1500
  %vm1502 = vcmp.lt.s32.totalorder %v1501, 0
  %v1503 = vsub.s32 0, %v1501
  %v1504 = vsel %vm1502, %v1503, %v1501
  %v1505 = vclz %v1504
  %v1506 = vsub.s32 %v1505, 2
  %vm1507 = vcmp.gt.s32.totalorder 0, %v1506
  %v1508 = vsel %vm1507, 0, %v1506
  %v1509 = vsub.s32 32, %v1508
  %v1510 = vshll.u32 %v1501, %v1508
  %v1511 = vshrl.u32 %v1493, %v1509
  %v1512 = vor.u32 %v1510, %v1511
  %v1513 = vsub.s32 4294967266, %v1508
  %v1514 = vadd.s32 %v1513, 127
  %v1515 = vshll.u32 %v1514, 23
  %v1516 = vor.u32 4788187, %v1515
  %v1517 = vand.u32 2147483647, %v1516
  %v1519 = vcvt.s32.f32 %v1512
  %v1520 = vmul.f32 %v1519, %v1517
  %v1521 = vxor.u32 %v1520, 2147483648
  %v1522 = vsel %vm1439, %v1521, %v1520
  %v1523 = vsub.s32 4, %v1499
  %v1524 = vsel %vm1439, %v1523, %v1499
  %v1525 = vsel %vm1438, %v915, %v1522
  %v1526 = vsel %vm1438, 0, %v1524
  %v1527 = vcosq.f32.pop %v1525
  %v1528 = vsinq.f32.pop %v1525
  %vm1529 = vweird.f32 %v915
  %v1530 = vand.u32 %v1526, 3
  %vm1531 = vcmp.lt.s32.totalorder %v1530, 2
  %vm1532 = vcmp.eq.s32.totalorder %v1530, 0
  %v1533 = vxor.u32 %v1528, 2147483648
  %v1534 = vsel %vm1532, %v1527, %v1533
  %vm1535 = vcmp.eq.s32.totalorder %v1530, 2
  %v1536 = vxor.u32 %v1527, 2147483648
  %v1537 = vsel %vm1535, %v1536, %v1528
  %v1538 = vsel %vm1531, %v1534, %v1537
  %v1539 = vsel %vm1529, nan, %v1538
  %v1540 = vand.u32 2147483647, %v916
  %vm1541 = vcmp.le.f32.partialorder %v1540, 0.7853982
  %vm1542 = vcmp.lt.s32.totalorder %v916, 0
  %v1543 = vand.u32 %v916, 2139095040
  %v1544 = vshrl.u32 %v1543, 23
  %v1545 = vsub.s32 %v1544, 127
  %v1546 = vand.u32 2147483647, %v916
  %v1547 = vand.u32 %v1546, 8388607
  %v1548 = vor.u32 %v1547, 8388608
  %v1549 = vsub.s32 0, %v1548
  %v1550 = vadd.s32 %v1545, 1
  %vm1551 = vcmp.gt.s32.totalorder %v1550, 0
  %v1552 = vsel %vm1551, %v1550, 0
  %v1553 = vshrl.u32 %v1552, 5
  %v1554 = vand.u32 %v1552, 31
  %v1555 = vsub.s32 32, %v1554
  %v1556 = vshrl.u32 683565275, %v1555
  %v1557 = vshll.u32 683565275, %v1554
  %v1558 = vshrl.u32 2475754826, %v1555
  %v1559 = vor.u32 %v1557, %v1558
  %v1560 = vshll.u32 2475754826, %v1554
  %v1561 = vshrl.u32 2131351028, %v1555
  %v1562 = vor.u32 %v1560, %v1561
  %v1563 = vshll.u32 2131351028, %v1554
  %v1564 = vshrl.u32 2102212464, %v1555
  %v1565 = vor.u32 %v1563, %v1564
  %v1566 = vshll.u32 2102212464, %v1554
  %v1567 = vshrl.u32 920167782, %v1555
  %v1568 = vor.u32 %v1566, %v1567
  %v1569 = vshll.u32 920167782, %v1554
  %v1570 = vshrl.u32 1326507024, %v1555
  %v1571 = vor.u32 %v1569, %v1570
  %vm1572 = vcmp.lt.s32.totalorder %v1553, 1
  %vm1573 = vcmp.lt.s32.totalorder %v1553, 2
  %vm1574 = vcmp.lt.s32.totalorder %v1553, 3
  %vm1575 = vcmp.lt.s32.totalorder %v1553, 4
  %v1576 = vsel %vm1572, %v1556, %v1559
  %v1577 = vsel %vm1575, %v1565, 2102212464
  %v1578 = vsel %vm1574, %v1562, %v1577
  %v1579 = vsel %vm1573, %v1576, %v1578
  %v1580 = vsel %vm1572, %v1559, %v1562
  %v1581 = vsel %vm1575, %v1568, 920167782
  %v1582 = vsel %vm1574, %v1565, %v1581
  %v1583 = vsel %vm1573, %v1580, %v1582
  %v1584 = vsel %vm1572, %v1562, %v1565
  %v1585 = vsel %vm1575, %v1571, 1326507024
  %v1586 = vsel %vm1574, %v1568, %v1585
  %v1587 = vsel %vm1573, %v1584, %v1586
  %v1588 = vshll.u32 %v1548, 8
  %v1589 = vmul.u32.u64.compose %v1588, %v1587
  %v1590 = vextract.low.u32 %v1589
  %v1591 = vextract.high.u32 %v1589
  %v1592 = vmul.u32.u64.compose %v1588, %v1583
  %v1593 = vextract.low.u32 %v1592
  %v1594 = vextract.high.u32 %v1592
  %v1595 = vmul.u32 %v1588, %v1579
  %v1596 = vadd.s32 %v1591, %v1593
  %vm1597 = vc.u32 %v1591, %v1593
  %v1598 = vadd.s32 %v1594, 1
  %v1599 = vsel %vm1597, %v1598, %v1594
  %v1600 = vadd.s32 %v1595, %v1599
  %v1601 = vadd.s32 %v1600, 536870912
  %v1602 = vshrl.u32 %v1601, 30
  %v1603 = vshll.u32 %v1602, 30
  %v1604 = vsub.s32 %v1600, %v1603
  %vm1605 = vcmp.lt.s32.totalorder %v1604, 0
  %v1606 = vsub.s32 0, %v1604
  %v1607 = vsel %vm1605, %v1606, %v1604
  %v1608 = vclz %v1607
  %v1609 = vsub.s32 %v1608, 2
  %vm1610 = vcmp.gt.s32.totalorder 0, %v1609
  %v1611 = vsel %vm1610, 0, %v1609
  %v1612 = vsub.s32 32, %v1611
  %v1613 = vshll.u32 %v1604, %v1611
  %v1614 = vshrl.u32 %v1596, %v1612
  %v1615 = vor.u32 %v1613, %v1614
  %v1616 = vsub.s32 4294967266, %v1611
  %v1617 = vadd.s32 %v1616, 127
  %v1618 = vshll.u32 %v1617, 23
  %v1619 = vor.u32 4788187, %v1618
  %v1620 = vand.u32 2147483647, %v1619
  %v1622 = vcvt.s32.f32 %v1615
  %v1623 = vmul.f32 %v1622, %v1620
  %v1624 = vxor.u32 %v1623, 2147483648
  %v1625 = vsel %vm1542, %v1624, %v1623
  %v1626 = vsub.s32 4, %v1602
  %v1627 = vsel %vm1542, %v1626, %v1602
  %v1628 = vsel %vm1541, %v916, %v1625
  %v1629 = vsel %vm1541, 0, %v1627
  %v1630 = vcosq.f32.pop %v1628
  %v1631 = vsinq.f32.pop %v1628
  %vm1632 = vweird.f32 %v916
  %v1633 = vand.u32 %v1629, 3
  %vm1634 = vcmp.lt.s32.totalorder %v1633, 2
  %vm1635 = vcmp.eq.s32.totalorder %v1633, 0
  %v1636 = vxor.u32 %v1631, 2147483648
  %v1637 = vsel %vm1635, %v1630, %v1636
  %vm1638 = vcmp.eq.s32.totalorder %v1633, 2
  %v1639 = vxor.u32 %v1630, 2147483648
  %v1640 = vsel %vm1638, %v1639, %v1631
  %v1641 = vsel %vm1634, %v1637, %v1640
  %v1642 = vsel %vm1632, nan, %v1641
  %v1643 = vand.u32 2147483647, %v917
  %vm1644 = vcmp.le.f32.partialorder %v1643, 0.7853982
  %vm1645 = vcmp.lt.s32.totalorder %v917, 0
  %v1646 = vand.u32 %v917, 2139095040
  %v1647 = vshrl.u32 %v1646, 23
  %v1648 = vsub.s32 %v1647, 127
  %v1649 = vand.u32 2147483647, %v917
  %v1650 = vand.u32 %v1649, 8388607
  %v1651 = vor.u32 %v1650, 8388608
  %v1652 = vsub.s32 0, %v1651
  %v1653 = vadd.s32 %v1648, 1
  %vm1654 = vcmp.gt.s32.totalorder %v1653, 0
  %v1655 = vsel %vm1654, %v1653, 0
  %v1656 = vshrl.u32 %v1655, 5
  %v1657 = vand.u32 %v1655, 31
  %v1658 = vsub.s32 32, %v1657
  %v1659 = vshrl.u32 683565275, %v1658
  %v1660 = vshll.u32 683565275, %v1657
  %v1661 = vshrl.u32 2475754826, %v1658
  %v1662 = vor.u32 %v1660, %v1661
  %v1663 = vshll.u32 2475754826, %v1657
  %v1664 = vshrl.u32 2131351028, %v1658
  %v1665 = vor.u32 %v1663, %v1664
  %v1666 = vshll.u32 2131351028, %v1657
  %v1667 = vshrl.u32 2102212464, %v1658
  %v1668 = vor.u32 %v1666, %v1667
  %v1669 = vshll.u32 2102212464, %v1657
  %v1670 = vshrl.u32 920167782, %v1658
  %v1671 = vor.u32 %v1669, %v1670
  %v1672 = vshll.u32 920167782, %v1657
  %v1673 = vshrl.u32 1326507024, %v1658
  %v1674 = vor.u32 %v1672, %v1673
  %vm1675 = vcmp.lt.s32.totalorder %v1656, 1
  %vm1676 = vcmp.lt.s32.totalorder %v1656, 2
  %vm1677 = vcmp.lt.s32.totalorder %v1656, 3
  %vm1678 = vcmp.lt.s32.totalorder %v1656, 4
  %v1679 = vsel %vm1675, %v1659, %v1662
  %v1680 = vsel %vm1678, %v1668, 2102212464
  %v1681 = vsel %vm1677, %v1665, %v1680
  %v1682 = vsel %vm1676, %v1679, %v1681
  %v1683 = vsel %vm1675, %v1662, %v1665
  %v1684 = vsel %vm1678, %v1671, 920167782
  %v1685 = vsel %vm1677, %v1668, %v1684
  %v1686 = vsel %vm1676, %v1683, %v1685
  %v1687 = vsel %vm1675, %v1665, %v1668
  %v1688 = vsel %vm1678, %v1674, 1326507024
  %v1689 = vsel %vm1677, %v1671, %v1688
  %v1690 = vsel %vm1676, %v1687, %v1689
  %v1691 = vshll.u32 %v1651, 8
  %v1692 = vmul.u32.u64.compose %v1691, %v1690
  %v1693 = vextract.low.u32 %v1692
  %v1694 = vextract.high.u32 %v1692
  %v1695 = vmul.u32.u64.compose %v1691, %v1686
  %v1696 = vextract.low.u32 %v1695
  %v1697 = vextract.high.u32 %v1695
  %v1698 = vmul.u32 %v1691, %v1682
  %v1699 = vadd.s32 %v1694, %v1696
  %vm1700 = vc.u32 %v1694, %v1696
  %v1701 = vadd.s32 %v1697, 1
  %v1702 = vsel %vm1700, %v1701, %v1697
  %v1703 = vadd.s32 %v1698, %v1702
  %v1704 = vadd.s32 %v1703, 536870912
  %v1705 = vshrl.u32 %v1704, 30
  %v1706 = vshll.u32 %v1705, 30
  %v1707 = vsub.s32 %v1703, %v1706
  %vm1708 = vcmp.lt.s32.totalorder %v1707, 0
  %v1709 = vsub.s32 0, %v1707
  %v1710 = vsel %vm1708, %v1709, %v1707
  %v1711 = vclz %v1710
  %v1712 = vsub.s32 %v1711, 2
  %vm1713 = vcmp.gt.s32.totalorder 0, %v1712
  %v1714 = vsel %vm1713, 0, %v1712
  %v1715 = vsub.s32 32, %v1714
  %v1716 = vshll.u32 %v1707, %v1714
  %v1717 = vshrl.u32 %v1699, %v1715
  %v1718 = vor.u32 %v1716, %v1717
  %v1719 = vsub.s32 4294967266, %v1714
  %v1720 = vadd.s32 %v1719, 127
  %v1721 = vshll.u32 %v1720, 23
  %v1722 = vor.u32 4788187, %v1721
  %v1723 = vand.u32 2147483647, %v1722
  %v1725 = vcvt.s32.f32 %v1718
  %v1726 = vmul.f32 %v1725, %v1723
  %v1727 = vxor.u32 %v1726, 2147483648
  %v1728 = vsel %vm1645, %v1727, %v1726
  %v1729 = vsub.s32 4, %v1705
  %v1730 = vsel %vm1645, %v1729, %v1705
  %v1731 = vsel %vm1644, %v917, %v1728
  %v1732 = vsel %vm1644, 0, %v1730
  %v1733 = vcosq.f32.pop %v1731
  %v1734 = vsinq.f32.pop %v1731
  %vm1735 = vweird.f32 %v917
  %v1736 = vand.u32 %v1732, 3
  %vm1737 = vcmp.lt.s32.totalorder %v1736, 2
  %vm1738 = vcmp.eq.s32.totalorder %v1736, 0
  %v1739 = vxor.u32 %v1734, 2147483648
  %v1740 = vsel %vm1738, %v1733, %v1739
  %vm1741 = vcmp.eq.s32.totalorder %v1736, 2
  %v1742 = vxor.u32 %v1733, 2147483648
  %v1743 = vsel %vm1741, %v1742, %v1734
  %v1744 = vsel %vm1737, %v1740, %v1743
  %v1745 = vsel %vm1735, nan, %v1744
  %s1746 = scalar_lea.vmem %s1, 224
  %1747 = vst [vmem:[%s1746] sm:$0xff] %v1021
  %1748 = vst [vmem:[%s1746 + $0x8] sm:$0xff] %v1125
  %1749 = vst [vmem:[%s1746 + $0x10] sm:$0xff] %v1229
  %1750 = vst [vmem:[%s1746 + $0x18] sm:$0xff] %v1333
  %s1751 = scalar_lea.vmem %s1, 256
  %1752 = vst [vmem:[%s1751] sm:$0xff] %v1436
  %1753 = vst [vmem:[%s1751 + $0x8] sm:$0xff] %v1539
  %1754 = vst [vmem:[%s1751 + $0x10] sm:$0xff] %v1642
  %1755 = vst [vmem:[%s1751 + $0x18] sm:$0xff] %v1745
  %v1756 = vmul.f32 %v1021, 2.0
  %v1757 = vmul.f32 %v1125, 2.0
  %v1758 = vmul.f32 %v1229, 2.0
  %v1759 = vmul.f32 %v1333, 2.0
  %v1760 = vmul.f32 %v1756, %v1436
  %v1761 = vmul.f32 %v1757, %v1539
  %v1762 = vmul.f32 %v1758, %v1642
  %v1763 = vmul.f32 %v1759, %v1745
  %v1764 = vmul.f32 %v1436, 2.0
  %v1765 = vmul.f32 %v1539, 2.0
  %v1766 = vmul.f32 %v1642, 2.0
  %v1767 = vmul.f32 %v1745, 2.0
  %v1768 = vmul.f32 %v1764, %v1436
  %v1769 = vmul.f32 %v1765, %v1539
  %v1770 = vmul.f32 %v1766, %v1642
  %v1771 = vmul.f32 %v1767, %v1745
  %v1772 = vsub.f32 %v1768, 1.0
  %v1773 = vsub.f32 %v1769, 1.0
  %v1774 = vsub.f32 %v1770, 1.0
  %v1775 = vsub.f32 %v1771, 1.0
  %s1776 = scalar_lea.vmem %s1, 288
  %1777 = vst [vmem:[%s1776] sm:$0xff] %v1760
  %1778 = vst [vmem:[%s1776 + $0x8] sm:$0xff] %v1761
  %1779 = vst [vmem:[%s1776 + $0x10] sm:$0xff] %v1762
  %1780 = vst [vmem:[%s1776 + $0x18] sm:$0xff] %v1763
  %s1781 = scalar_lea.vmem %s1, 320
  %1782 = vst [vmem:[%s1781] sm:$0xff] %v1772
  %1783 = vst [vmem:[%s1781 + $0x8] sm:$0xff] %v1773
  %1784 = vst [vmem:[%s1781 + $0x10] sm:$0xff] %v1774
  %1785 = vst [vmem:[%s1781 + $0x18] sm:$0xff] %v1775
  %v1786 = vmul.f32 %v1760, 2.0
  %v1787 = vmul.f32 %v1761, 2.0
  %v1788 = vmul.f32 %v1762, 2.0
  %v1789 = vmul.f32 %v1763, 2.0
  %v1790 = vmul.f32 %v1786, %v1772
  %v1791 = vmul.f32 %v1787, %v1773
  %v1792 = vmul.f32 %v1788, %v1774
  %v1793 = vmul.f32 %v1789, %v1775
  %v1794 = vmul.f32 %v1772, 2.0
  %v1795 = vmul.f32 %v1773, 2.0
  %v1796 = vmul.f32 %v1774, 2.0
  %v1797 = vmul.f32 %v1775, 2.0
  %v1798 = vmul.f32 %v1794, %v1772
  %v1799 = vmul.f32 %v1795, %v1773
  %v1800 = vmul.f32 %v1796, %v1774
  %v1801 = vmul.f32 %v1797, %v1775
  %v1802 = vsub.f32 %v1798, 1.0
  %v1803 = vsub.f32 %v1799, 1.0
  %v1804 = vsub.f32 %v1800, 1.0
  %v1805 = vsub.f32 %v1801, 1.0
  %s1806 = scalar_lea.vmem %s1, 352
  %1807 = vst [vmem:[%s1806] sm:$0xff] %v1790
  %1808 = vst [vmem:[%s1806 + $0x8] sm:$0xff] %v1791
  %1809 = vst [vmem:[%s1806 + $0x10] sm:$0xff] %v1792
  %1810 = vst [vmem:[%s1806 + $0x18] sm:$0xff] %v1793
  %s1811 = scalar_lea.vmem %s1, 384
  %1812 = vst [vmem:[%s1811] sm:$0xff] %v1802
  %1813 = vst [vmem:[%s1811 + $0x8] sm:$0xff] %v1803
  %1814 = vst [vmem:[%s1811 + $0x10] sm:$0xff] %v1804
  %1815 = vst [vmem:[%s1811 + $0x18] sm:$0xff] %v1805
  // Predicated region
  $region6: #{positional_encoding.1} parent=0 // pred_check
    _
  $region7: #{positional_encoding.1} parent=0 // pred_check_branch
    %1817 = sbr.rel (0) target = $region9
  $region8: #{positional_encoding.1} parent=0 // pred_region
    _
  $region9: #{positional_encoding.1} parent=0 // pred_fallthru
    _
  // Predicated region
  $region10: #{positional_encoding.1} parent=0 // pred_check
    _
  $region11: #{positional_encoding.1} parent=0 // pred_check_branch
    %1819 = sbr.rel (0) target = $region13
  $region12: #{positional_encoding.1} parent=0 // pred_region
    _
  $region13: #{positional_encoding.1} parent=0 // pred_fallthru
    _

</llo_original>
